<compile_context>
chip_gen: v6e
topology: v6e:2x2x1
jax: 0.10.0
libtpu: 0.0.40
codegen_flags: <defaults>
</compile_context>

<pallas_src>
import numpy as np
import jax
import jax.numpy as jnp
from jax.experimental import pallas as pl
from jax.experimental.pallas import tpu as pltpu


LANE = 128      # TPU lane width: per-level column blocks padded to this
SUBLANE = 8     # TPU sublane width: per-channel batch blocks padded to this


def _round_up(x, m):
    return (x + m - 1) // m * m


# ---------------------------------------------------------------------------
# Combined (strided subsample -> AdaptiveAvgPool2d -> flatten) linear operator.
# Each level's column block is padded to LANE columns so per-level slices of
# the matmul result are lane-tile aligned.
# ---------------------------------------------------------------------------
def _build_subsample_pool_operator(S, strides, out_m, lane_pad):
    """K[r*S + c, lvl*lane_pad + i*m + j] such that x_flat @ K equals, per
    level, the stride-s subsample of the (S, S) map followed by average
    pooling to (m, m), flattened row-major; pad columns are zero."""
    cols = lane_pad * len(strides)
    K = np.zeros((S * S, cols), dtype=np.float32)
    for lvl, (s, m) in enumerate(zip(strides, out_m)):
        o = S // s                 # spatial size after the strided view
        f = o // m                 # pooling factor (1 when no pooling)
        w = 1.0 / float(f * f)
        off = lvl * lane_pad
        for i in range(m):
            for j in range(m):
                for a in range(f):
                    for b in range(f):
                        r = s * (f * i + a)
                        c = s * (f * j + b)
                        K[r * S + c, off + i * m + j] += w
    return jnp.asarray(K)


# ---------------------------------------------------------------------------
# Fused kernel: pool/subsample (MXU) -> 1x1 projection (VPU, SMEM scalars)
#               -> in-register flattened concat -> classifier (MXU).
# ---------------------------------------------------------------------------
def _make_encoder_kernel(npad, cin, cout, nlvl):
    def kernel(fpn_w_ref, fpn_b_ref, x_ref, k_ref,
               w1_ref, b1_ref, g_ref, be_ref, w2_ref, b2_ref, o_ref):
        # (1) One lane-dense MXU matmul folds strided subsample + adaptive
        #     average pool + flatten for every level and every input channel.
        #     x_ref rows are ordered (channel, batch-padded-to-8).
        z = jnp.dot(x_ref[...], k_ref[...],
                    preferred_element_type=jnp.float32)     # (cin*npad, nlvl*LANE)
        # Aligned whole-tile sublane views, one per input channel.
        z_ch = [z[ci * npad:(ci + 1) * npad, :] for ci in range(cin)]

        # (2) Per-level 1x1-conv channel projection on the VPU with scalar
        #     weights from SMEM. Results are concatenated in registers into the
        #     (lane-padded) flattened classifier-input layout: level-major,
        #     then Cout, each in an aligned 128-lane block.
        blocks = []
        for lvl in range(nlvl):
            col = lvl * LANE
            zc = [zc_i[:, col:col + LANE] for zc_i in z_ch]
            for co in range(cout):
                widx = (lvl * cout + co) * cin
                acc = fpn_w_ref[widx] * zc[0]
                for ci in range(1, cin):
                    acc = acc + fpn_w_ref[widx + ci] * zc[ci]
                blocks.append(acc + fpn_b_ref[lvl * cout + co])
        xf = jnp.concatenate(blocks, axis=-1)                # (npad, nlvl*cout*LANE)

        # (3) Fused classifier: Linear -> SiLU -> LayerNorm -> Linear.
        #     (Dropout is identity at inference.)  Pad lanes of xf carry the
        #     per-block bias, but the matching rows of w1 are zero, so they
        #     contribute nothing.
        h = jnp.dot(xf, w1_ref[...],
                    preferred_element_type=jnp.float32) + b1_ref[...]
        h = h * pl.reciprocal(1.0 + jnp.exp(-h), approx=True)   # SiLU on EUP
        mean = jnp.mean(h, axis=-1, keepdims=True)
        var = jnp.mean((h - mean) ** 2, axis=-1, keepdims=True)
        hn = (h - mean) * jax.lax.rsqrt(var + 1e-5)              # LayerNorm eps=1e-5
        hn = hn * g_ref[...] + be_ref[...]
        out = jnp.dot(hn, w2_ref[...],
                      preferred_element_type=jnp.float32) + b2_ref[...]
        o_ref[...] = out.astype(o_ref.dtype)                     # unmasked, lane-dense

    return kernel


# ---------------------------------------------------------------------------
# Encoder.forward
# ---------------------------------------------------------------------------
def encoder_forward(x, params):
    N, Cin, S, S2 = x.shape
    assert S == S2, "square inputs expected"
    strides = (2, 4, 8)                       # stand-in pyramid levels
    nlvl = len(strides)
    Cout = params["fpn_w0"].shape[0]

    out_m, lens = [], []
    for s in strides:
        o = S // s
        if o > 8:
            # TODO(synk): AdaptiveAvgPool2d(8) with o % 8 != 0 uses uneven
            # windows; only the exact-multiple case is implemented here.
            assert o % 8 == 0
            m = 8
        else:
            m = o
        out_m.append(m)
        lens.append(m * m)

    D = Cout * sum(lens)
    H = params["w1"].shape[1]
    num_classes = params["w2"].shape[1]
    assert params["w1"].shape[0] == D

    Npad = _round_up(N, SUBLANE)
    Cpad = _round_up(num_classes, LANE)
    Dpad = nlvl * Cout * LANE

    # Constant operator folding subsample + pool + flatten for all levels,
    # per-level column blocks padded to 128 lanes.
    K = _build_subsample_pool_operator(S, strides, out_m, LANE)  # (S*S, nlvl*LANE)

    # Rows ordered (channel, batch) with the batch padded to a sublane multiple
    # so each input channel is an aligned 8-sublane block inside the kernel.
    x_pad = jnp.pad(x, ((0, Npad - N), (0, 0), (0, 0), (0, 0)))
    x2 = jnp.transpose(x_pad, (1, 0, 2, 3)).reshape(Cin * Npad, S * S)

    # Scatter w1's rows into the lane-padded xf layout (zero rows for padding,
    # so whatever sits in the pad lanes of xf contributes nothing).
    w1 = params["w1"]
    w1_blocks = []
    off = 0
    for lvl in range(nlvl):
        ln = lens[lvl]
        for co in range(Cout):
            blk = w1[off + co * ln: off + (co + 1) * ln, :]
            w1_blocks.append(jnp.pad(blk, ((0, LANE - ln), (0, 0))))
        off += Cout * ln
    w1_pad = jnp.concatenate(w1_blocks, axis=0)                  # (Dpad, H)

    # Pad the class dimension to a lane multiple so the output store is
    # unmasked; slice back after the call.
    w2_pad = jnp.pad(params["w2"], ((0, 0), (0, Cpad - num_classes)))
    b2_pad = jnp.pad(params["b2"], (0, Cpad - num_classes)).reshape(1, Cpad)

    b1_v = params["b1"].reshape(1, H)
    g_v = params["gamma"].reshape(1, H)
    be_v = params["beta"].reshape(1, H)

    # Tiny FPN projection params go to SMEM as flat scalar tables.
    fpn_w = jnp.concatenate([params[f"fpn_w{l}"].reshape(-1) for l in range(nlvl)])
    fpn_b = jnp.concatenate([params[f"fpn_b{l}"].reshape(-1) for l in range(nlvl)])

    smem = pl.BlockSpec(memory_space=pltpu.MemorySpace.SMEM)
    vmem = pl.BlockSpec(memory_space=pltpu.MemorySpace.VMEM)

    kernel = _make_encoder_kernel(Npad, Cin, Cout, nlvl)

    operands = (fpn_w, fpn_b, x2, K, w1_pad, b1_v, g_v, be_v, w2_pad, b2_pad)
    flops = int(2 * (Cin * Npad) * (S * S) * (nlvl * LANE)       # pooling matmul
                + 2 * nlvl * Cout * Cin * Npad * LANE            # 1x1 projection
                + 2 * Npad * Dpad * H                            # classifier L1
                + 10 * Npad * H                                  # SiLU + LayerNorm
                + 2 * Npad * H * Cpad)                           # classifier L2
    bytes_accessed = int(4 * (sum(int(a.size) for a in operands) + Npad * Cpad))

    out = pl.pallas_call(
        kernel,
        out_shape=jax.ShapeDtypeStruct((Npad, Cpad), jnp.float32),
        in_specs=[smem, smem, vmem, vmem, vmem, vmem, vmem, vmem, vmem, vmem],
        out_specs=vmem,
        compiler_params=pltpu.CompilerParams(vmem_limit_bytes=32 * 1024 * 1024),
        cost_estimate=pl.CostEstimate(flops=flops,
                                      transcendentals=int(Npad * H + Npad),
                                      bytes_accessed=bytes_accessed),
    )(*operands)

    return out[:N, :num_classes]


# ---------------------------------------------------------------------------
# Pure-JAX reference (mirrors the original project-then-pool ordering).
# ---------------------------------------------------------------------------
def encoder_forward_ref(x, params):
    feat_maps = {}
    for lvl, stride in enumerate((2, 4, 8)):
        xs = x[:, :, ::stride, ::stride]
        w = params[f"fpn_w{lvl}"]
        b = params[f"fpn_b{lvl}"]
        y = jnp.einsum('oc,nchw->nohw', w, xs) + b[None, :, None, None]
        feat_maps[str(lvl)] = y
    feats = []
    for k in sorted(feat_maps.keys()):
        y = feat_maps[k]
        N, C, W, _ = y.shape
        if W > 8:
            f = W // 8
            y = y.reshape(N, C, 8, f, 8, f).mean(axis=(3, 5))
        feats.append(y.reshape(N, -1))
    xf = jnp.concatenate(feats, axis=1)
    h = xf @ params["w1"] + params["b1"]
    h = h * jax.nn.sigmoid(h)
    mean = h.mean(-1, keepdims=True)
    var = ((h - mean) ** 2).mean(-1, keepdims=True)
    hn = (h - mean) / jnp.sqrt(var + 1e-5) * params["gamma"] + params["beta"]
    return hn @ params["w2"] + params["b2"]


if __name__ == "__main__":
    key = jax.random.PRNGKey(0)
    keys = jax.random.split(key, 16)

    N, Cin, S = 2, 3, 32          # input image: NCHW
    C_fpn = 4                     # stand-in FPN channels per level
    # pyramid spatial sizes: 16 (pooled to 8), 8, 4 -> flattened dim:
    D = C_fpn * 8 * 8 + C_fpn * 8 * 8 + C_fpn * 4 * 4   # 576
    H = 128                       # small stand-in for hidden=1024 (lane-dense)
    num_classes = 16              # small stand-in for num_classes=1000

    x = jax.random.normal(keys[0], (N, Cin, S, S), dtype=jnp.float32)

    params = {}
    for lvl in range(3):
        params[f"fpn_w{lvl}"] = 0.1 * jax.random.normal(
            keys[1 + lvl], (C_fpn, Cin), dtype=jnp.float32)
        params[f"fpn_b{lvl}"] = 0.01 * jax.random.normal(
            keys[4 + lvl], (C_fpn,), dtype=jnp.float32)
    params["w1"] = 0.05 * jax.random.normal(keys[8], (D, H), dtype=jnp.float32)
    params["b1"] = 0.01 * jax.random.normal(keys[9], (H,), dtype=jnp.float32)
    params["gamma"] = 1.0 + 0.05 * jax.random.normal(keys[10], (H,), dtype=jnp.float32)
    params["beta"] = 0.01 * jax.random.normal(keys[11], (H,), dtype=jnp.float32)
    params["w2"] = 0.05 * jax.random.normal(keys[12], (H, num_classes), dtype=jnp.float32)
    params["b2"] = 0.01 * jax.random.normal(keys[13], (num_classes,), dtype=jnp.float32)

    out = jax.block_until_ready(encoder_forward(x, params))
    ref = jax.block_until_ready(encoder_forward_ref(x, params))

    assert out.shape == (N, num_classes), out.shape
    # Tolerance loosened slightly for the EUP approximate-reciprocal SiLU path.
    np.testing.assert_allclose(np.asarray(out), np.asarray(ref),
                               rtol=2e-3, atol=2e-3)
    print("KERNEL_OK")
</pallas_src>

<mosaic_0001>
module attributes {stable_mosaic.version = 11 : i64} {
  func.func @kernel(%arg0: memref<36xf32, #tpu.memory_space<smem>>, %arg1: memref<12xf32, #tpu.memory_space<smem>>, %arg2: memref<24x1024xf32, #tpu.memory_space<vmem>>, %arg3: memref<1024x384xf32, #tpu.memory_space<vmem>>, %arg4: memref<1536x128xf32, #tpu.memory_space<vmem>>, %arg5: memref<1x128xf32, #tpu.memory_space<vmem>>, %arg6: memref<1x128xf32, #tpu.memory_space<vmem>>, %arg7: memref<1x128xf32, #tpu.memory_space<vmem>>, %arg8: memref<128x128xf32, #tpu.memory_space<vmem>>, %arg9: memref<1x128xf32, #tpu.memory_space<vmem>>, %arg10: memref<8x128xf32, #tpu.memory_space<vmem>>) attributes {dimension_semantics = [], scalar_prefetch = 0 : i64, scratch_operands = 0 : i64, tpu.core_type = #tpu.core_type<tc>} {
    %c0 = arith.constant 0 : index
    %c0_0 = arith.constant 0 : index
    %0 = vector.load %arg2[%c0, %c0_0] : memref<24x1024xf32, #tpu.memory_space<vmem>>, vector<24x1024xf32>
    %c0_1 = arith.constant 0 : index
    %c0_2 = arith.constant 0 : index
    %1 = vector.load %arg3[%c0_1, %c0_2] : memref<1024x384xf32, #tpu.memory_space<vmem>>, vector<1024x384xf32>
    %cst = arith.constant dense<0.000000e+00> : vector<24x384xf32>
    %2 = tpu.matmul %0, %1, %cst {dimension_numbers = #tpu.dot_dimension_numbers<[1], [0], [0], [1], [0, 0, 1, 1], [], []>} : vector<24x1024xf32>, vector<1024x384xf32>, vector<24x384xf32> -> vector<24x384xf32>
    %3 = vector.extract_strided_slice %2 {offsets = [0, 0], sizes = [8, 384], strides = [1, 1]} : vector<24x384xf32> to vector<8x384xf32>
    %4 = vector.extract_strided_slice %2 {offsets = [8, 0], sizes = [8, 384], strides = [1, 1]} : vector<24x384xf32> to vector<8x384xf32>
    %5 = vector.extract_strided_slice %2 {offsets = [16, 0], sizes = [8, 384], strides = [1, 1]} : vector<24x384xf32> to vector<8x384xf32>
    %6 = vector.extract_strided_slice %3 {offsets = [0, 0], sizes = [8, 128], strides = [1, 1]} : vector<8x384xf32> to vector<8x128xf32>
    %7 = vector.extract_strided_slice %4 {offsets = [0, 0], sizes = [8, 128], strides = [1, 1]} : vector<8x384xf32> to vector<8x128xf32>
    %8 = vector.extract_strided_slice %5 {offsets = [0, 0], sizes = [8, 128], strides = [1, 1]} : vector<8x384xf32> to vector<8x128xf32>
    %c0_3 = arith.constant 0 : index
    %9 = memref.load %arg0[%c0_3] : memref<36xf32, #tpu.memory_space<smem>>
    %10 = vector.broadcast %9 : f32 to vector<8x128xf32>
    %11 = arith.mulf %10, %6 : vector<8x128xf32>
    %c1 = arith.constant 1 : index
    %12 = memref.load %arg0[%c1] : memref<36xf32, #tpu.memory_space<smem>>
    %13 = vector.broadcast %12 : f32 to vector<8x128xf32>
    %14 = arith.mulf %13, %7 : vector<8x128xf32>
    %15 = arith.addf %11, %14 : vector<8x128xf32>
    %c2 = arith.constant 2 : index
    %16 = memref.load %arg0[%c2] : memref<36xf32, #tpu.memory_space<smem>>
    %17 = vector.broadcast %16 : f32 to vector<8x128xf32>
    %18 = arith.mulf %17, %8 : vector<8x128xf32>
    %19 = arith.addf %15, %18 : vector<8x128xf32>
    %c0_4 = arith.constant 0 : index
    %20 = memref.load %arg1[%c0_4] : memref<12xf32, #tpu.memory_space<smem>>
    %21 = vector.broadcast %20 : f32 to vector<8x128xf32>
    %22 = arith.addf %19, %21 : vector<8x128xf32>
    %c3 = arith.constant 3 : index
    %23 = memref.load %arg0[%c3] : memref<36xf32, #tpu.memory_space<smem>>
    %24 = vector.broadcast %23 : f32 to vector<8x128xf32>
    %25 = arith.mulf %24, %6 : vector<8x128xf32>
    %c4 = arith.constant 4 : index
    %26 = memref.load %arg0[%c4] : memref<36xf32, #tpu.memory_space<smem>>
    %27 = vector.broadcast %26 : f32 to vector<8x128xf32>
    %28 = arith.mulf %27, %7 : vector<8x128xf32>
    %29 = arith.addf %25, %28 : vector<8x128xf32>
    %c5 = arith.constant 5 : index
    %30 = memref.load %arg0[%c5] : memref<36xf32, #tpu.memory_space<smem>>
    %31 = vector.broadcast %30 : f32 to vector<8x128xf32>
    %32 = arith.mulf %31, %8 : vector<8x128xf32>
    %33 = arith.addf %29, %32 : vector<8x128xf32>
    %c1_5 = arith.constant 1 : index
    %34 = memref.load %arg1[%c1_5] : memref<12xf32, #tpu.memory_space<smem>>
    %35 = vector.broadcast %34 : f32 to vector<8x128xf32>
    %36 = arith.addf %33, %35 : vector<8x128xf32>
    %c6 = arith.constant 6 : index
    %37 = memref.load %arg0[%c6] : memref<36xf32, #tpu.memory_space<smem>>
    %38 = vector.broadcast %37 : f32 to vector<8x128xf32>
    %39 = arith.mulf %38, %6 : vector<8x128xf32>
    %c7 = arith.constant 7 : index
    %40 = memref.load %arg0[%c7] : memref<36xf32, #tpu.memory_space<smem>>
    %41 = vector.broadcast %40 : f32 to vector<8x128xf32>
    %42 = arith.mulf %41, %7 : vector<8x128xf32>
    %43 = arith.addf %39, %42 : vector<8x128xf32>
    %c8 = arith.constant 8 : index
    %44 = memref.load %arg0[%c8] : memref<36xf32, #tpu.memory_space<smem>>
    %45 = vector.broadcast %44 : f32 to vector<8x128xf32>
    %46 = arith.mulf %45, %8 : vector<8x128xf32>
    %47 = arith.addf %43, %46 : vector<8x128xf32>
    %c2_6 = arith.constant 2 : index
    %48 = memref.load %arg1[%c2_6] : memref<12xf32, #tpu.memory_space<smem>>
    %49 = vector.broadcast %48 : f32 to vector<8x128xf32>
    %50 = arith.addf %47, %49 : vector<8x128xf32>
    %c9 = arith.constant 9 : index
    %51 = memref.load %arg0[%c9] : memref<36xf32, #tpu.memory_space<smem>>
    %52 = vector.broadcast %51 : f32 to vector<8x128xf32>
    %53 = arith.mulf %52, %6 : vector<8x128xf32>
    %c10 = arith.constant 10 : index
    %54 = memref.load %arg0[%c10] : memref<36xf32, #tpu.memory_space<smem>>
    %55 = vector.broadcast %54 : f32 to vector<8x128xf32>
    %56 = arith.mulf %55, %7 : vector<8x128xf32>
    %57 = arith.addf %53, %56 : vector<8x128xf32>
    %c11 = arith.constant 11 : index
    %58 = memref.load %arg0[%c11] : memref<36xf32, #tpu.memory_space<smem>>
    %59 = vector.broadcast %58 : f32 to vector<8x128xf32>
    %60 = arith.mulf %59, %8 : vector<8x128xf32>
    %61 = arith.addf %57, %60 : vector<8x128xf32>
    %c3_7 = arith.constant 3 : index
    %62 = memref.load %arg1[%c3_7] : memref<12xf32, #tpu.memory_space<smem>>
    %63 = vector.broadcast %62 : f32 to vector<8x128xf32>
    %64 = arith.addf %61, %63 : vector<8x128xf32>
    %65 = vector.extract_strided_slice %3 {offsets = [0, 128], sizes = [8, 128], strides = [1, 1]} : vector<8x384xf32> to vector<8x128xf32>
    %66 = vector.extract_strided_slice %4 {offsets = [0, 128], sizes = [8, 128], strides = [1, 1]} : vector<8x384xf32> to vector<8x128xf32>
    %67 = vector.extract_strided_slice %5 {offsets = [0, 128], sizes = [8, 128], strides = [1, 1]} : vector<8x384xf32> to vector<8x128xf32>
    %c12 = arith.constant 12 : index
    %68 = memref.load %arg0[%c12] : memref<36xf32, #tpu.memory_space<smem>>
    %69 = vector.broadcast %68 : f32 to vector<8x128xf32>
    %70 = arith.mulf %69, %65 : vector<8x128xf32>
    %c13 = arith.constant 13 : index
    %71 = memref.load %arg0[%c13] : memref<36xf32, #tpu.memory_space<smem>>
    %72 = vector.broadcast %71 : f32 to vector<8x128xf32>
    %73 = arith.mulf %72, %66 : vector<8x128xf32>
    %74 = arith.addf %70, %73 : vector<8x128xf32>
    %c14 = arith.constant 14 : index
    %75 = memref.load %arg0[%c14] : memref<36xf32, #tpu.memory_space<smem>>
    %76 = vector.broadcast %75 : f32 to vector<8x128xf32>
    %77 = arith.mulf %76, %67 : vector<8x128xf32>
    %78 = arith.addf %74, %77 : vector<8x128xf32>
    %c4_8 = arith.constant 4 : index
    %79 = memref.load %arg1[%c4_8] : memref<12xf32, #tpu.memory_space<smem>>
    %80 = vector.broadcast %79 : f32 to vector<8x128xf32>
    %81 = arith.addf %78, %80 : vector<8x128xf32>
    %c15 = arith.constant 15 : index
    %82 = memref.load %arg0[%c15] : memref<36xf32, #tpu.memory_space<smem>>
    %83 = vector.broadcast %82 : f32 to vector<8x128xf32>
    %84 = arith.mulf %83, %65 : vector<8x128xf32>
    %c16 = arith.constant 16 : index
    %85 = memref.load %arg0[%c16] : memref<36xf32, #tpu.memory_space<smem>>
    %86 = vector.broadcast %85 : f32 to vector<8x128xf32>
    %87 = arith.mulf %86, %66 : vector<8x128xf32>
    %88 = arith.addf %84, %87 : vector<8x128xf32>
    %c17 = arith.constant 17 : index
    %89 = memref.load %arg0[%c17] : memref<36xf32, #tpu.memory_space<smem>>
    %90 = vector.broadcast %89 : f32 to vector<8x128xf32>
    %91 = arith.mulf %90, %67 : vector<8x128xf32>
    %92 = arith.addf %88, %91 : vector<8x128xf32>
    %c5_9 = arith.constant 5 : index
    %93 = memref.load %arg1[%c5_9] : memref<12xf32, #tpu.memory_space<smem>>
    %94 = vector.broadcast %93 : f32 to vector<8x128xf32>
    %95 = arith.addf %92, %94 : vector<8x128xf32>
    %c18 = arith.constant 18 : index
    %96 = memref.load %arg0[%c18] : memref<36xf32, #tpu.memory_space<smem>>
    %97 = vector.broadcast %96 : f32 to vector<8x128xf32>
    %98 = arith.mulf %97, %65 : vector<8x128xf32>
    %c19 = arith.constant 19 : index
    %99 = memref.load %arg0[%c19] : memref<36xf32, #tpu.memory_space<smem>>
    %100 = vector.broadcast %99 : f32 to vector<8x128xf32>
    %101 = arith.mulf %100, %66 : vector<8x128xf32>
    %102 = arith.addf %98, %101 : vector<8x128xf32>
    %c20 = arith.constant 20 : index
    %103 = memref.load %arg0[%c20] : memref<36xf32, #tpu.memory_space<smem>>
    %104 = vector.broadcast %103 : f32 to vector<8x128xf32>
    %105 = arith.mulf %104, %67 : vector<8x128xf32>
    %106 = arith.addf %102, %105 : vector<8x128xf32>
    %c6_10 = arith.constant 6 : index
    %107 = memref.load %arg1[%c6_10] : memref<12xf32, #tpu.memory_space<smem>>
    %108 = vector.broadcast %107 : f32 to vector<8x128xf32>
    %109 = arith.addf %106, %108 : vector<8x128xf32>
    %c21 = arith.constant 21 : index
    %110 = memref.load %arg0[%c21] : memref<36xf32, #tpu.memory_space<smem>>
    %111 = vector.broadcast %110 : f32 to vector<8x128xf32>
    %112 = arith.mulf %111, %65 : vector<8x128xf32>
    %c22 = arith.constant 22 : index
    %113 = memref.load %arg0[%c22] : memref<36xf32, #tpu.memory_space<smem>>
    %114 = vector.broadcast %113 : f32 to vector<8x128xf32>
    %115 = arith.mulf %114, %66 : vector<8x128xf32>
    %116 = arith.addf %112, %115 : vector<8x128xf32>
    %c23 = arith.constant 23 : index
    %117 = memref.load %arg0[%c23] : memref<36xf32, #tpu.memory_space<smem>>
    %118 = vector.broadcast %117 : f32 to vector<8x128xf32>
    %119 = arith.mulf %118, %67 : vector<8x128xf32>
    %120 = arith.addf %116, %119 : vector<8x128xf32>
    %c7_11 = arith.constant 7 : index
    %121 = memref.load %arg1[%c7_11] : memref<12xf32, #tpu.memory_space<smem>>
    %122 = vector.broadcast %121 : f32 to vector<8x128xf32>
    %123 = arith.addf %120, %122 : vector<8x128xf32>
    %124 = vector.extract_strided_slice %3 {offsets = [0, 256], sizes = [8, 128], strides = [1, 1]} : vector<8x384xf32> to vector<8x128xf32>
    %125 = vector.extract_strided_slice %4 {offsets = [0, 256], sizes = [8, 128], strides = [1, 1]} : vector<8x384xf32> to vector<8x128xf32>
    %126 = vector.extract_strided_slice %5 {offsets = [0, 256], sizes = [8, 128], strides = [1, 1]} : vector<8x384xf32> to vector<8x128xf32>
    %c24 = arith.constant 24 : index
    %127 = memref.load %arg0[%c24] : memref<36xf32, #tpu.memory_space<smem>>
    %128 = vector.broadcast %127 : f32 to vector<8x128xf32>
    %129 = arith.mulf %128, %124 : vector<8x128xf32>
    %c25 = arith.constant 25 : index
    %130 = memref.load %arg0[%c25] : memref<36xf32, #tpu.memory_space<smem>>
    %131 = vector.broadcast %130 : f32 to vector<8x128xf32>
    %132 = arith.mulf %131, %125 : vector<8x128xf32>
    %133 = arith.addf %129, %132 : vector<8x128xf32>
    %c26 = arith.constant 26 : index
    %134 = memref.load %arg0[%c26] : memref<36xf32, #tpu.memory_space<smem>>
    %135 = vector.broadcast %134 : f32 to vector<8x128xf32>
    %136 = arith.mulf %135, %126 : vector<8x128xf32>
    %137 = arith.addf %133, %136 : vector<8x128xf32>
    %c8_12 = arith.constant 8 : index
    %138 = memref.load %arg1[%c8_12] : memref<12xf32, #tpu.memory_space<smem>>
    %139 = vector.broadcast %138 : f32 to vector<8x128xf32>
    %140 = arith.addf %137, %139 : vector<8x128xf32>
    %c27 = arith.constant 27 : index
    %141 = memref.load %arg0[%c27] : memref<36xf32, #tpu.memory_space<smem>>
    %142 = vector.broadcast %141 : f32 to vector<8x128xf32>
    %143 = arith.mulf %142, %124 : vector<8x128xf32>
    %c28 = arith.constant 28 : index
    %144 = memref.load %arg0[%c28] : memref<36xf32, #tpu.memory_space<smem>>
    %145 = vector.broadcast %144 : f32 to vector<8x128xf32>
    %146 = arith.mulf %145, %125 : vector<8x128xf32>
    %147 = arith.addf %143, %146 : vector<8x128xf32>
    %c29 = arith.constant 29 : index
    %148 = memref.load %arg0[%c29] : memref<36xf32, #tpu.memory_space<smem>>
    %149 = vector.broadcast %148 : f32 to vector<8x128xf32>
    %150 = arith.mulf %149, %126 : vector<8x128xf32>
    %151 = arith.addf %147, %150 : vector<8x128xf32>
    %c9_13 = arith.constant 9 : index
    %152 = memref.load %arg1[%c9_13] : memref<12xf32, #tpu.memory_space<smem>>
    %153 = vector.broadcast %152 : f32 to vector<8x128xf32>
    %154 = arith.addf %151, %153 : vector<8x128xf32>
    %c30 = arith.constant 30 : index
    %155 = memref.load %arg0[%c30] : memref<36xf32, #tpu.memory_space<smem>>
    %156 = vector.broadcast %155 : f32 to vector<8x128xf32>
    %157 = arith.mulf %156, %124 : vector<8x128xf32>
    %c31 = arith.constant 31 : index
    %158 = memref.load %arg0[%c31] : memref<36xf32, #tpu.memory_space<smem>>
    %159 = vector.broadcast %158 : f32 to vector<8x128xf32>
    %160 = arith.mulf %159, %125 : vector<8x128xf32>
    %161 = arith.addf %157, %160 : vector<8x128xf32>
    %c32 = arith.constant 32 : index
    %162 = memref.load %arg0[%c32] : memref<36xf32, #tpu.memory_space<smem>>
    %163 = vector.broadcast %162 : f32 to vector<8x128xf32>
    %164 = arith.mulf %163, %126 : vector<8x128xf32>
    %165 = arith.addf %161, %164 : vector<8x128xf32>
    %c10_14 = arith.constant 10 : index
    %166 = memref.load %arg1[%c10_14] : memref<12xf32, #tpu.memory_space<smem>>
    %167 = vector.broadcast %166 : f32 to vector<8x128xf32>
    %168 = arith.addf %165, %167 : vector<8x128xf32>
    %c33 = arith.constant 33 : index
    %169 = memref.load %arg0[%c33] : memref<36xf32, #tpu.memory_space<smem>>
    %170 = vector.broadcast %169 : f32 to vector<8x128xf32>
    %171 = arith.mulf %170, %124 : vector<8x128xf32>
    %c34 = arith.constant 34 : index
    %172 = memref.load %arg0[%c34] : memref<36xf32, #tpu.memory_space<smem>>
    %173 = vector.broadcast %172 : f32 to vector<8x128xf32>
    %174 = arith.mulf %173, %125 : vector<8x128xf32>
    %175 = arith.addf %171, %174 : vector<8x128xf32>
    %c35 = arith.constant 35 : index
    %176 = memref.load %arg0[%c35] : memref<36xf32, #tpu.memory_space<smem>>
    %177 = vector.broadcast %176 : f32 to vector<8x128xf32>
    %178 = arith.mulf %177, %126 : vector<8x128xf32>
    %179 = arith.addf %175, %178 : vector<8x128xf32>
    %c11_15 = arith.constant 11 : index
    %180 = memref.load %arg1[%c11_15] : memref<12xf32, #tpu.memory_space<smem>>
    %181 = vector.broadcast %180 : f32 to vector<8x128xf32>
    %182 = arith.addf %179, %181 : vector<8x128xf32>
    %183 = tpu.concatenate %22, %36, %50, %64, %81, %95, %109, %123, %140, %154, %168, %182 in 1 : vector<8x128xf32>, vector<8x128xf32>, vector<8x128xf32>, vector<8x128xf32>, vector<8x128xf32>, vector<8x128xf32>, vector<8x128xf32>, vector<8x128xf32>, vector<8x128xf32>, vector<8x128xf32>, vector<8x128xf32>, vector<8x128xf32> -> vector<8x1536xf32>
    %c0_16 = arith.constant 0 : index
    %c0_17 = arith.constant 0 : index
    %184 = vector.load %arg4[%c0_16, %c0_17] : memref<1536x128xf32, #tpu.memory_space<vmem>>, vector<1536x128xf32>
    %cst_18 = arith.constant dense<0.000000e+00> : vector<8x128xf32>
    %185 = tpu.matmul %183, %184, %cst_18 {dimension_numbers = #tpu.dot_dimension_numbers<[1], [0], [0], [1], [0, 0, 1, 1], [], []>} : vector<8x1536xf32>, vector<1536x128xf32>, vector<8x128xf32> -> vector<8x128xf32>
    %c0_19 = arith.constant 0 : index
    %c0_20 = arith.constant 0 : index
    %186 = vector.load %arg5[%c0_19, %c0_20] : memref<1x128xf32, #tpu.memory_space<vmem>>, vector<1x128xf32>
    %187 = vector.broadcast %186 : vector<1x128xf32> to vector<8x128xf32>
    %188 = arith.addf %185, %187 : vector<8x128xf32>
    %cst_21 = arith.constant 0.000000e+00 : f32
    %189 = vector.broadcast %cst_21 : f32 to vector<8x128xf32>
    %190 = arith.subf %189, %188 : vector<8x128xf32>
    %191 = math.exp %190 : vector<8x128xf32>
    %cst_22 = arith.constant 1.000000e+00 : f32
    %192 = vector.broadcast %cst_22 : f32 to vector<8x128xf32>
    %193 = arith.addf %192, %191 : vector<8x128xf32>
    %194 = tpu.reciprocal %193 {approx = true} : vector<8x128xf32> -> vector<8x128xf32>
    %195 = arith.mulf %188, %194 : vector<8x128xf32>
    %cst_23 = arith.constant dense<0.000000e+00> : vector<8xf32>
    %196 = vector.multi_reduction <add>, %195, %cst_23 [1] : vector<8x128xf32> to vector<8xf32>
    %197 = vector.shape_cast %196 : vector<8xf32> to vector<8x1xf32>
    %cst_24 = arith.constant 1.280000e+02 : f32
    %198 = vector.broadcast %cst_24 : f32 to vector<8x1xf32>
    %199 = arith.divf %197, %198 : vector<8x1xf32>
    %200 = vector.broadcast %199 : vector<8x1xf32> to vector<8x128xf32>
    %201 = arith.subf %195, %200 : vector<8x128xf32>
    %202 = arith.mulf %201, %201 : vector<8x128xf32>
    %cst_25 = arith.constant dense<0.000000e+00> : vector<8xf32>
    %203 = vector.multi_reduction <add>, %202, %cst_25 [1] : vector<8x128xf32> to vector<8xf32>
    %204 = vector.shape_cast %203 : vector<8xf32> to vector<8x1xf32>
    %cst_26 = arith.constant 1.280000e+02 : f32
    %205 = vector.broadcast %cst_26 : f32 to vector<8x1xf32>
    %206 = arith.divf %204, %205 : vector<8x1xf32>
    %207 = vector.broadcast %199 : vector<8x1xf32> to vector<8x128xf32>
    %208 = arith.subf %195, %207 : vector<8x128xf32>
    %cst_27 = arith.constant 9.99999974E-6 : f32
    %209 = vector.broadcast %cst_27 : f32 to vector<8x1xf32>
    %210 = arith.addf %206, %209 : vector<8x1xf32>
    %211 = math.rsqrt %210 : vector<8x1xf32>
    %212 = vector.broadcast %211 : vector<8x1xf32> to vector<8x128xf32>
    %213 = arith.mulf %208, %212 : vector<8x128xf32>
    %c0_28 = arith.constant 0 : index
    %c0_29 = arith.constant 0 : index
    %214 = vector.load %arg6[%c0_28, %c0_29] : memref<1x128xf32, #tpu.memory_space<vmem>>, vector<1x128xf32>
    %215 = vector.broadcast %214 : vector<1x128xf32> to vector<8x128xf32>
    %216 = arith.mulf %213, %215 : vector<8x128xf32>
    %c0_30 = arith.constant 0 : index
    %c0_31 = arith.constant 0 : index
    %217 = vector.load %arg7[%c0_30, %c0_31] : memref<1x128xf32, #tpu.memory_space<vmem>>, vector<1x128xf32>
    %218 = vector.broadcast %217 : vector<1x128xf32> to vector<8x128xf32>
    %219 = arith.addf %216, %218 : vector<8x128xf32>
    %c0_32 = arith.constant 0 : index
    %c0_33 = arith.constant 0 : index
    %220 = vector.load %arg8[%c0_32, %c0_33] : memref<128x128xf32, #tpu.memory_space<vmem>>, vector<128x128xf32>
    %cst_34 = arith.constant dense<0.000000e+00> : vector<8x128xf32>
    %221 = tpu.matmul %219, %220, %cst_34 {dimension_numbers = #tpu.dot_dimension_numbers<[1], [0], [0], [1], [0, 0, 1, 1], [], []>} : vector<8x128xf32>, vector<128x128xf32>, vector<8x128xf32> -> vector<8x128xf32>
    %c0_35 = arith.constant 0 : index
    %c0_36 = arith.constant 0 : index
    %222 = vector.load %arg9[%c0_35, %c0_36] : memref<1x128xf32, #tpu.memory_space<vmem>>, vector<1x128xf32>
    %223 = vector.broadcast %222 : vector<1x128xf32> to vector<8x128xf32>
    %224 = arith.addf %221, %223 : vector<8x128xf32>
    %c0_37 = arith.constant 0 : index
    %c0_38 = arith.constant 0 : index
    %225 = vector.load %arg10[%c0_37, %c0_38] : memref<8x128xf32, #tpu.memory_space<vmem>>, vector<8x128xf32>
    tpu.vector_store %arg10[%c0_37, %c0_38], %224 {strides = array<i32>} : memref<8x128xf32, #tpu.memory_space<vmem>>, vector<8x128xf32>,
    return
  }
}

</mosaic_0001>

<llo_original>
// kernel: tpu_custom_call.1
$region0: #{tpu_custom_call.1}
  #allocation0 [shape = 'u32[]', space=smem, size = 0x4, offset = 0x4, fixed_abs, tag = 'smem constant byte address 0x4 - core index']
  #allocation1 [shape = 'u32[144,128]{1,0:T(1,128)}', space=vmem, size = 0x12000, scoped, tag = 'internal scratch']
  %s0 = inlined_call_operand.hbm [shape: f32[36], index: 0, kind: input, shape index: {}]
  %s1 = inlined_call_operand.hbm [shape: f32[12], index: 1, kind: input, shape index: {}]
  %s2 = inlined_call_operand.hbm [shape: f32[24,1024], index: 2, kind: input, shape index: {}]
  %s3 = inlined_call_operand.hbm [shape: f32[1024,384], index: 3, kind: input, shape index: {}]
  %s4 = inlined_call_operand.hbm [shape: f32[1536,128], index: 4, kind: input, shape index: {}]
  %s5 = inlined_call_operand.hbm [shape: f32[1,128], index: 5, kind: input, shape index: {}]
  %s6 = inlined_call_operand.hbm [shape: f32[1,128], index: 6, kind: input, shape index: {}]
  %s7 = inlined_call_operand.hbm [shape: f32[1,128], index: 7, kind: input, shape index: {}]
  %s8 = inlined_call_operand.hbm [shape: f32[128,128], index: 8, kind: input, shape index: {}]
  %s9 = inlined_call_operand.hbm [shape: f32[1,128], index: 9, kind: input, shape index: {}]
  %s10 = inlined_call_operand.hbm [shape: f32[8,128], index: 10, kind: output, shape index: {}]
  %s11 = sld [smem:[#allocation0]]
  $region90: #{tpu_custom_call.1} parent=0
    _
  %s13 = ssub.s32 1, %s11
  %s14 = scalar_select 0, %s13, %s11
  $region1: #{tpu_custom_call.1} parent=0
    #allocation2 [shape = 'u8[512]{0}', space=smem, size = 0x200, scoped, tag = 'input window, operand 0, single buffered']
    #allocation3 [shape = 's32[1]{0}', space=sflag, size = 0x4, scoped, tag = 'scoped memory for tpu_custom_call.1']
    #allocation4 [shape = 's32[1]{0}', space=sflag, size = 0x4, scoped, tag = 'scoped memory for tpu_custom_call.1']
    #allocation5 [shape = 's32[1]{0}', space=sflag, size = 0x4, scoped, tag = 'scoped memory for tpu_custom_call.1']
    #allocation6 [shape = 'u8[512]{0}', space=smem, size = 0x200, scoped, tag = 'input window, operand 1, single buffered']
    #allocation7 [shape = 's32[1]{0}', space=sflag, size = 0x4, scoped, tag = 'scoped memory for tpu_custom_call.1']
    #allocation8 [shape = 'u8[98304]{0}', space=vmem, size = 0x18000, scoped, tag = 'input window, operand 2, single buffered']
    #allocation9 [shape = 'u8[1572864]{0}', space=vmem, size = 0x180000, scoped, tag = 'input window, operand 3, single buffered']
    #allocation10 [shape = 's32[1]{0}', space=sflag, size = 0x4, scoped, tag = 'scoped memory for tpu_custom_call.1']
    #allocation11 [shape = 'u8[786432]{0}', space=vmem, size = 0xc0000, scoped, tag = 'input window, operand 4, single buffered']
    #allocation12 [shape = 'u8[512]{0}', space=vmem, size = 0x400, scoped, tag = 'input window, operand 5, single buffered']
    #allocation13 [shape = 's32[1]{0}', space=sflag, size = 0x4, scoped, tag = 'scoped memory for tpu_custom_call.1']
    #allocation14 [shape = 'u8[512]{0}', space=vmem, size = 0x400, scoped, tag = 'input window, operand 6, single buffered']
    #allocation15 [shape = 'u8[512]{0}', space=vmem, size = 0x400, scoped, tag = 'input window, operand 7, single buffered']
    #allocation16 [shape = 's32[1]{0}', space=sflag, size = 0x4, scoped, tag = 'scoped memory for tpu_custom_call.1']
    #allocation17 [shape = 'u8[65536]{0}', space=vmem, size = 0x10000, scoped, tag = 'input window, operand 8, single buffered']
    #allocation18 [shape = 'u8[512]{0}', space=vmem, size = 0x400, scoped, tag = 'input window, operand 9, single buffered']
    #allocation19 [shape = 's32[1]{0}', space=sflag, size = 0x4, scoped, tag = 'scoped memory for tpu_custom_call.1']
    #allocation20 [shape = 'u8[4096]{0}', space=vmem, size = 0x1000, scoped, tag = 'output window, operand 0, single buffered']
    %15 = vsyncpa [#allocation5], 0
    %16 = vsyncpa [#allocation7], 0
    %17 = vsyncpa [#allocation3], 0
    %18 = vsyncpa [#allocation10], 0
    %19 = vsyncpa [#allocation13], 0
    %20 = vsyncpa [#allocation16], 0
    %21 = vsyncpa [#allocation19], 0
    %22 = vsyncpa [#allocation4], 0
    // Predicated region
    $region2: #{tpu_custom_call.1} parent=1 // pred_check
      _
    $region3: #{tpu_custom_call.1} parent=1 // pred_check_branch
      %24 = sbr.rel (0) target = $region5
    $region4: #{tpu_custom_call.1} parent=1 // pred_region
      %s26 = ssub.s32 16, 16
      %27 = vsyncadd [#allocation5], %s26
      %30 = dma.hbm_to_smem %s0, 16, [#allocation2], [#allocation5]
    $region5: #{tpu_custom_call.1} parent=1 // pred_fallthru
      _
    // Predicated region
    $region6: #{tpu_custom_call.1} parent=1 // pred_check
      _
    $region7: #{tpu_custom_call.1} parent=1 // pred_check_branch
      %32 = sbr.rel (0) target = $region9
    $region8: #{tpu_custom_call.1} parent=1 // pred_region
      %s34 = ssub.s32 16, 16
      %35 = vsyncadd [#allocation7], %s34
      %38 = dma.hbm_to_smem %s1, 16, [#allocation6], [#allocation7]
    $region9: #{tpu_custom_call.1} parent=1 // pred_fallthru
      _
    // Predicated region
    $region10: #{tpu_custom_call.1} parent=1 // pred_check
      _
    $region11: #{tpu_custom_call.1} parent=1 // pred_check_branch
      %40 = sbr.rel (0) target = $region13
    $region12: #{tpu_custom_call.1} parent=1 // pred_region
      %s42 = ssub.s32 3072, 3072
      %43 = vsyncadd [#allocation3], %s42
      %s44 = sshll.u32 [#allocation8], 4
      %s45 = int_to_ptr.vmem [resolvable:$true] %s44
      %50 = dma.hbm_to_vmem [thread:$0]  %s2, 3072, %s45, [#allocation3], 1024, 1024, 64
    $region13: #{tpu_custom_call.1} parent=1 // pred_fallthru
      _
    // Predicated region
    $region14: #{tpu_custom_call.1} parent=1 // pred_check
      _
    $region15: #{tpu_custom_call.1} parent=1 // pred_check_branch
      %52 = sbr.rel (0) target = $region17
    $region16: #{tpu_custom_call.1} parent=1 // pred_region
      %s54 = ssub.s32 49152, 49152
      %55 = vsyncadd [#allocation10], %s54
      %s56 = sshll.u32 [#allocation9], 4
      %s57 = int_to_ptr.vmem [resolvable:$true] %s56
      %62 = dma.hbm_to_vmem [thread:$0]  %s3, 49152, %s57, [#allocation10], 384, 384, 24
    $region17: #{tpu_custom_call.1} parent=1 // pred_fallthru
      _
    // Predicated region
    $region18: #{tpu_custom_call.1} parent=1 // pred_check
      _
    $region19: #{tpu_custom_call.1} parent=1 // pred_check_branch
      %64 = sbr.rel (0) target = $region21
    $region20: #{tpu_custom_call.1} parent=1 // pred_region
      %s66 = ssub.s32 24576, 24576
      %67 = vsyncadd [#allocation10], %s66
      %s68 = sshll.u32 [#allocation11], 4
      %s69 = int_to_ptr.vmem [resolvable:$true] %s68
      %74 = dma.hbm_to_vmem [thread:$0]  %s4, 24576, %s69, [#allocation10], 128, 128, 8
    $region21: #{tpu_custom_call.1} parent=1 // pred_fallthru
      _
    // Predicated region
    $region22: #{tpu_custom_call.1} parent=1 // pred_check
      _
    $region23: #{tpu_custom_call.1} parent=1 // pred_check_branch
      %76 = sbr.rel (0) target = $region25
    $region24: #{tpu_custom_call.1} parent=1 // pred_region
      %s78 = ssub.s32 16, 16
      %79 = vsyncadd [#allocation13], %s78
      %s81 = sshll.u32 [#allocation12], 4
      %s82 = int_to_ptr.vmem [resolvable:$true] %s81
      %84 = dma.hbm_to_vmem [thread:$0]  %s5, 16, %s82, [#allocation13]
    $region25: #{tpu_custom_call.1} parent=1 // pred_fallthru
      _
    // Predicated region
    $region26: #{tpu_custom_call.1} parent=1 // pred_check
      _
    $region27: #{tpu_custom_call.1} parent=1 // pred_check_branch
      %86 = sbr.rel (0) target = $region29
    $region28: #{tpu_custom_call.1} parent=1 // pred_region
      %s88 = ssub.s32 16, 16
      %89 = vsyncadd [#allocation13], %s88
      %s91 = sshll.u32 [#allocation14], 4
      %s92 = int_to_ptr.vmem [resolvable:$true] %s91
      %94 = dma.hbm_to_vmem [thread:$0]  %s6, 16, %s92, [#allocation13]
    $region29: #{tpu_custom_call.1} parent=1 // pred_fallthru
      _
    // Predicated region
    $region30: #{tpu_custom_call.1} parent=1 // pred_check
      _
    $region31: #{tpu_custom_call.1} parent=1 // pred_check_branch
      %96 = sbr.rel (0) target = $region33
    $region32: #{tpu_custom_call.1} parent=1 // pred_region
      %s98 = ssub.s32 16, 16
      %99 = vsyncadd [#allocation16], %s98
      %s101 = sshll.u32 [#allocation15], 4
      %s102 = int_to_ptr.vmem [resolvable:$true] %s101
      %104 = dma.hbm_to_vmem [thread:$0]  %s7, 16, %s102, [#allocation16]
    $region33: #{tpu_custom_call.1} parent=1 // pred_fallthru
      _
    // Predicated region
    $region34: #{tpu_custom_call.1} parent=1 // pred_check
      _
    $region35: #{tpu_custom_call.1} parent=1 // pred_check_branch
      %106 = sbr.rel (0) target = $region37
    $region36: #{tpu_custom_call.1} parent=1 // pred_region
      %s108 = ssub.s32 2048, 2048
      %109 = vsyncadd [#allocation16], %s108
      %s110 = sshll.u32 [#allocation17], 4
      %s111 = int_to_ptr.vmem [resolvable:$true] %s110
      %116 = dma.hbm_to_vmem [thread:$0]  %s8, 2048, %s111, [#allocation16], 128, 128, 8
    $region37: #{tpu_custom_call.1} parent=1 // pred_fallthru
      _
    // Predicated region
    $region38: #{tpu_custom_call.1} parent=1 // pred_check
      _
    $region39: #{tpu_custom_call.1} parent=1 // pred_check_branch
      %118 = sbr.rel (0) target = $region41
    $region40: #{tpu_custom_call.1} parent=1 // pred_region
      %s120 = ssub.s32 16, 16
      %121 = vsyncadd [#allocation19], %s120
      %s123 = sshll.u32 [#allocation18], 4
      %s124 = int_to_ptr.vmem [resolvable:$true] %s123
      %126 = dma.hbm_to_vmem [thread:$0]  %s9, 16, %s124, [#allocation19]
    $region41: #{tpu_custom_call.1} parent=1 // pred_fallthru
      _
    // Predicated region
    $region42: #{tpu_custom_call.1} parent=1 // pred_check
      _
    $region43: #{tpu_custom_call.1} parent=1 // pred_check_branch
      %128 = sbr.rel (0) target = $region45
    $region44: #{tpu_custom_call.1} parent=1 // pred_region
      %129 = dma.done [#allocation5], 16
    $region45: #{tpu_custom_call.1} parent=1 // pred_fallthru
      _
    // Predicated region
    $region46: #{tpu_custom_call.1} parent=1 // pred_check
      _
    $region47: #{tpu_custom_call.1} parent=1 // pred_check_branch
      %131 = sbr.rel (0) target = $region49
    $region48: #{tpu_custom_call.1} parent=1 // pred_region
      %132 = dma.done [#allocation7], 16
    $region49: #{tpu_custom_call.1} parent=1 // pred_fallthru
      _
    // Predicated region
    $region50: #{tpu_custom_call.1} parent=1 // pred_check
      _
    $region51: #{tpu_custom_call.1} parent=1 // pred_check_branch
      %134 = sbr.rel (0) target = $region53
    $region52: #{tpu_custom_call.1} parent=1 // pred_region
      %135 = dma.done [#allocation3], 3072
    $region53: #{tpu_custom_call.1} parent=1 // pred_fallthru
      _
    // Predicated region
    $region54: #{tpu_custom_call.1} parent=1 // pred_check
      _
    $region55: #{tpu_custom_call.1} parent=1 // pred_check_branch
      %137 = sbr.rel (0) target = $region57
    $region56: #{tpu_custom_call.1} parent=1 // pred_region
      %138 = dma.done [#allocation10], 49152
    $region57: #{tpu_custom_call.1} parent=1 // pred_fallthru
      _
    // Predicated region
    $region58: #{tpu_custom_call.1} parent=1 // pred_check
      _
    $region59: #{tpu_custom_call.1} parent=1 // pred_check_branch
      %140 = sbr.rel (0) target = $region61
    $region60: #{tpu_custom_call.1} parent=1 // pred_region
      %141 = dma.done [#allocation10], 24576
    $region61: #{tpu_custom_call.1} parent=1 // pred_fallthru
      _
    // Predicated region
    $region62: #{tpu_custom_call.1} parent=1 // pred_check
      _
    $region63: #{tpu_custom_call.1} parent=1 // pred_check_branch
      %143 = sbr.rel (0) target = $region65
    $region64: #{tpu_custom_call.1} parent=1 // pred_region
      %144 = dma.done [#allocation13], 16
    $region65: #{tpu_custom_call.1} parent=1 // pred_fallthru
      _
    // Predicated region
    $region66: #{tpu_custom_call.1} parent=1 // pred_check
      _
    $region67: #{tpu_custom_call.1} parent=1 // pred_check_branch
      %146 = sbr.rel (0) target = $region69
    $region68: #{tpu_custom_call.1} parent=1 // pred_region
      %147 = dma.done [#allocation13], 16
    $region69: #{tpu_custom_call.1} parent=1 // pred_fallthru
      _
    // Predicated region
    $region70: #{tpu_custom_call.1} parent=1 // pred_check
      _
    $region71: #{tpu_custom_call.1} parent=1 // pred_check_branch
      %149 = sbr.rel (0) target = $region73
    $region72: #{tpu_custom_call.1} parent=1 // pred_region
      %150 = dma.done [#allocation16], 16
    $region73: #{tpu_custom_call.1} parent=1 // pred_fallthru
      _
    // Predicated region
    $region74: #{tpu_custom_call.1} parent=1 // pred_check
      _
    $region75: #{tpu_custom_call.1} parent=1 // pred_check_branch
      %152 = sbr.rel (0) target = $region77
    $region76: #{tpu_custom_call.1} parent=1 // pred_region
      %153 = dma.done [#allocation16], 2048
    $region77: #{tpu_custom_call.1} parent=1 // pred_fallthru
      _
    // Predicated region
    $region78: #{tpu_custom_call.1} parent=1 // pred_check
      _
    $region79: #{tpu_custom_call.1} parent=1 // pred_check_branch
      %155 = sbr.rel (0) target = $region81
    $region80: #{tpu_custom_call.1} parent=1 // pred_region
      %156 = dma.done [#allocation19], 16
    $region81: #{tpu_custom_call.1} parent=1 // pred_fallthru
      _
    %157 = sfence
    %v158 = vld [vmem:[#allocation8] sm:$0xff]
    %v159 = vld [vmem:[#allocation8 + $0x8] sm:$0xff]
    %v160 = vld [vmem:[#allocation8 + $0x10] sm:$0xff]
    %v161 = vld [vmem:[#allocation8 + $0x18] sm:$0xff]
    %v162 = vld [vmem:[#allocation8 + $0x20] sm:$0xff]
    %v163 = vld [vmem:[#allocation8 + $0x28] sm:$0xff]
    %v164 = vld [vmem:[#allocation8 + $0x30] sm:$0xff]
    %v165 = vld [vmem:[#allocation8 + $0x38] sm:$0xff]
    %v166 = vld [vmem:[#allocation8 + $0x40] sm:$0xff]
    %v167 = vld [vmem:[#allocation8 + $0x48] sm:$0xff]
    %v168 = vld [vmem:[#allocation8 + $0x50] sm:$0xff]
    %v169 = vld [vmem:[#allocation8 + $0x58] sm:$0xff]
    %v170 = vld [vmem:[#allocation8 + $0x60] sm:$0xff]
    %v171 = vld [vmem:[#allocation8 + $0x68] sm:$0xff]
    %v172 = vld [vmem:[#allocation8 + $0x70] sm:$0xff]
    %v173 = vld [vmem:[#allocation8 + $0x78] sm:$0xff]
    %v174 = vld [vmem:[#allocation8 + $0x80] sm:$0xff]
    %v175 = vld [vmem:[#allocation8 + $0x88] sm:$0xff]
    %v176 = vld [vmem:[#allocation8 + $0x90] sm:$0xff]
    %v177 = vld [vmem:[#allocation8 + $0x98] sm:$0xff]
    %v178 = vld [vmem:[#allocation8 + $0xa0] sm:$0xff]
    %v179 = vld [vmem:[#allocation8 + $0xa8] sm:$0xff]
    %v180 = vld [vmem:[#allocation8 + $0xb0] sm:$0xff]
    %v181 = vld [vmem:[#allocation8 + $0xb8] sm:$0xff]
    %v182 = vld [vmem:[#allocation9] sm:$0xff]
    %v183 = vld [vmem:[#allocation9 + $0x8] sm:$0xff]
    %v184 = vld [vmem:[#allocation9 + $0x10] sm:$0xff]
    %v185 = vld [vmem:[#allocation9 + $0x18] sm:$0xff]
    %v186 = vld [vmem:[#allocation9 + $0x20] sm:$0xff]
    %v187 = vld [vmem:[#allocation9 + $0x28] sm:$0xff]
    %v188 = vld [vmem:[#allocation9 + $0x30] sm:$0xff]
    %v189 = vld [vmem:[#allocation9 + $0x38] sm:$0xff]
    %v190 = vld [vmem:[#allocation9 + $0x40] sm:$0xff]
    %v191 = vld [vmem:[#allocation9 + $0x48] sm:$0xff]
    %v192 = vld [vmem:[#allocation9 + $0x50] sm:$0xff]
    %v193 = vld [vmem:[#allocation9 + $0x58] sm:$0xff]
    %v194 = vld [vmem:[#allocation9 + $0x60] sm:$0xff]
    %v195 = vld [vmem:[#allocation9 + $0x68] sm:$0xff]
    %v196 = vld [vmem:[#allocation9 + $0x70] sm:$0xff]
    %v197 = vld [vmem:[#allocation9 + $0x78] sm:$0xff]
    %v198 = vld [vmem:[#allocation9 + $0x80] sm:$0xff]
    %v199 = vld [vmem:[#allocation9 + $0x88] sm:$0xff]
    %v200 = vld [vmem:[#allocation9 + $0x90] sm:$0xff]
    %v201 = vld [vmem:[#allocation9 + $0x98] sm:$0xff]
    %v202 = vld [vmem:[#allocation9 + $0xa0] sm:$0xff]
    %v203 = vld [vmem:[#allocation9 + $0xa8] sm:$0xff]
    %v204 = vld [vmem:[#allocation9 + $0xb0] sm:$0xff]
    %v205 = vld [vmem:[#allocation9 + $0xb8] sm:$0xff]
    %v206 = vld [vmem:[#allocation9 + $0xc0] sm:$0xff]
    %v207 = vld [vmem:[#allocation9 + $0xc8] sm:$0xff]
    %v208 = vld [vmem:[#allocation9 + $0xd0] sm:$0xff]
    %v209 = vld [vmem:[#allocation9 + $0xd8] sm:$0xff]
    %v210 = vld [vmem:[#allocation9 + $0xe0] sm:$0xff]
    %v211 = vld [vmem:[#allocation9 + $0xe8] sm:$0xff]
    %v212 = vld [vmem:[#allocation9 + $0xf0] sm:$0xff]
    %v213 = vld [vmem:[#allocation9 + $0xf8] sm:$0xff]
    %v214 = vld [vmem:[#allocation9 + $0x100] sm:$0xff]
    %v215 = vld [vmem:[#allocation9 + $0x108] sm:$0xff]
    %v216 = vld [vmem:[#allocation9 + $0x110] sm:$0xff]
    %v217 = vld [vmem:[#allocation9 + $0x118] sm:$0xff]
    %v218 = vld [vmem:[#allocation9 + $0x120] sm:$0xff]
    %v219 = vld [vmem:[#allocation9 + $0x128] sm:$0xff]
    %v220 = vld [vmem:[#allocation9 + $0x130] sm:$0xff]
    %v221 = vld [vmem:[#allocation9 + $0x138] sm:$0xff]
    %v222 = vld [vmem:[#allocation9 + $0x140] sm:$0xff]
    %v223 = vld [vmem:[#allocation9 + $0x148] sm:$0xff]
    %v224 = vld [vmem:[#allocation9 + $0x150] sm:$0xff]
    %v225 = vld [vmem:[#allocation9 + $0x158] sm:$0xff]
    %v226 = vld [vmem:[#allocation9 + $0x160] sm:$0xff]
    %v227 = vld [vmem:[#allocation9 + $0x168] sm:$0xff]
    %v228 = vld [vmem:[#allocation9 + $0x170] sm:$0xff]
    %v229 = vld [vmem:[#allocation9 + $0x178] sm:$0xff]
    %v230 = vld [vmem:[#allocation9 + $0x180] sm:$0xff]
    %v231 = vld [vmem:[#allocation9 + $0x188] sm:$0xff]
    %v232 = vld [vmem:[#allocation9 + $0x190] sm:$0xff]
    %v233 = vld [vmem:[#allocation9 + $0x198] sm:$0xff]
    %v234 = vld [vmem:[#allocation9 + $0x1a0] sm:$0xff]
    %v235 = vld [vmem:[#allocation9 + $0x1a8] sm:$0xff]
    %v236 = vld [vmem:[#allocation9 + $0x1b0] sm:$0xff]
    %v237 = vld [vmem:[#allocation9 + $0x1b8] sm:$0xff]
    %v238 = vld [vmem:[#allocation9 + $0x1c0] sm:$0xff]
    %v239 = vld [vmem:[#allocation9 + $0x1c8] sm:$0xff]
    %v240 = vld [vmem:[#allocation9 + $0x1d0] sm:$0xff]
    %v241 = vld [vmem:[#allocation9 + $0x1d8] sm:$0xff]
    %v242 = vld [vmem:[#allocation9 + $0x1e0] sm:$0xff]
    %v243 = vld [vmem:[#allocation9 + $0x1e8] sm:$0xff]
    %v244 = vld [vmem:[#allocation9 + $0x1f0] sm:$0xff]
    %v245 = vld [vmem:[#allocation9 + $0x1f8] sm:$0xff]
    %v246 = vld [vmem:[#allocation9 + $0x200] sm:$0xff]
    %v247 = vld [vmem:[#allocation9 + $0x208] sm:$0xff]
    %v248 = vld [vmem:[#allocation9 + $0x210] sm:$0xff]
    %v249 = vld [vmem:[#allocation9 + $0x218] sm:$0xff]
    %v250 = vld [vmem:[#allocation9 + $0x220] sm:$0xff]
    %v251 = vld [vmem:[#allocation9 + $0x228] sm:$0xff]
    %v252 = vld [vmem:[#allocation9 + $0x230] sm:$0xff]
    %v253 = vld [vmem:[#allocation9 + $0x238] sm:$0xff]
    %v254 = vld [vmem:[#allocation9 + $0x240] sm:$0xff]
    %v255 = vld [vmem:[#allocation9 + $0x248] sm:$0xff]
    %v256 = vld [vmem:[#allocation9 + $0x250] sm:$0xff]
    %v257 = vld [vmem:[#allocation9 + $0x258] sm:$0xff]
    %v258 = vld [vmem:[#allocation9 + $0x260] sm:$0xff]
    %v259 = vld [vmem:[#allocation9 + $0x268] sm:$0xff]
    %v260 = vld [vmem:[#allocation9 + $0x270] sm:$0xff]
    %v261 = vld [vmem:[#allocation9 + $0x278] sm:$0xff]
    %v262 = vld [vmem:[#allocation9 + $0x280] sm:$0xff]
    %v263 = vld [vmem:[#allocation9 + $0x288] sm:$0xff]
    %v264 = vld [vmem:[#allocation9 + $0x290] sm:$0xff]
    %v265 = vld [vmem:[#allocation9 + $0x298] sm:$0xff]
    %v266 = vld [vmem:[#allocation9 + $0x2a0] sm:$0xff]
    %v267 = vld [vmem:[#allocation9 + $0x2a8] sm:$0xff]
    %v268 = vld [vmem:[#allocation9 + $0x2b0] sm:$0xff]
    %v269 = vld [vmem:[#allocation9 + $0x2b8] sm:$0xff]
    %v270 = vld [vmem:[#allocation9 + $0x2c0] sm:$0xff]
    %v271 = vld [vmem:[#allocation9 + $0x2c8] sm:$0xff]
    %v272 = vld [vmem:[#allocation9 + $0x2d0] sm:$0xff]
    %v273 = vld [vmem:[#allocation9 + $0x2d8] sm:$0xff]
    %v274 = vld [vmem:[#allocation9 + $0x2e0] sm:$0xff]
    %v275 = vld [vmem:[#allocation9 + $0x2e8] sm:$0xff]
    %v276 = vld [vmem:[#allocation9 + $0x2f0] sm:$0xff]
    %v277 = vld [vmem:[#allocation9 + $0x2f8] sm:$0xff]
    %v278 = vld [vmem:[#allocation9 + $0x300] sm:$0xff]
    %v279 = vld [vmem:[#allocation9 + $0x308] sm:$0xff]
    %v280 = vld [vmem:[#allocation9 + $0x310] sm:$0xff]
    %v281 = vld [vmem:[#allocation9 + $0x318] sm:$0xff]
    %v282 = vld [vmem:[#allocation9 + $0x320] sm:$0xff]
    %v283 = vld [vmem:[#allocation9 + $0x328] sm:$0xff]
    %v284 = vld [vmem:[#allocation9 + $0x330] sm:$0xff]
    %v285 = vld [vmem:[#allocation9 + $0x338] sm:$0xff]
    %v286 = vld [vmem:[#allocation9 + $0x340] sm:$0xff]
    %v287 = vld [vmem:[#allocation9 + $0x348] sm:$0xff]
    %v288 = vld [vmem:[#allocation9 + $0x350] sm:$0xff]
    %v289 = vld [vmem:[#allocation9 + $0x358] sm:$0xff]
    %v290 = vld [vmem:[#allocation9 + $0x360] sm:$0xff]
    %v291 = vld [vmem:[#allocation9 + $0x368] sm:$0xff]
    %v292 = vld [vmem:[#allocation9 + $0x370] sm:$0xff]
    %v293 = vld [vmem:[#allocation9 + $0x378] sm:$0xff]
    %v294 = vld [vmem:[#allocation9 + $0x380] sm:$0xff]
    %v295 = vld [vmem:[#allocation9 + $0x388] sm:$0xff]
    %v296 = vld [vmem:[#allocation9 + $0x390] sm:$0xff]
    %v297 = vld [vmem:[#allocation9 + $0x398] sm:$0xff]
    %v298 = vld [vmem:[#allocation9 + $0x3a0] sm:$0xff]
    %v299 = vld [vmem:[#allocation9 + $0x3a8] sm:$0xff]
    %v300 = vld [vmem:[#allocation9 + $0x3b0] sm:$0xff]
    %v301 = vld [vmem:[#allocation9 + $0x3b8] sm:$0xff]
    %v302 = vld [vmem:[#allocation9 + $0x3c0] sm:$0xff]
    %v303 = vld [vmem:[#allocation9 + $0x3c8] sm:$0xff]
    %v304 = vld [vmem:[#allocation9 + $0x3d0] sm:$0xff]
    %v305 = vld [vmem:[#allocation9 + $0x3d8] sm:$0xff]
    %v306 = vld [vmem:[#allocation9 + $0x3e0] sm:$0xff]
    %v307 = vld [vmem:[#allocation9 + $0x3e8] sm:$0xff]
    %v308 = vld [vmem:[#allocation9 + $0x3f0] sm:$0xff]
    %v309 = vld [vmem:[#allocation9 + $0x3f8] sm:$0xff]
    %v310 = vld [vmem:[#allocation9 + $0x400] sm:$0xff]
    %v311 = vld [vmem:[#allocation9 + $0x408] sm:$0xff]
    %v312 = vld [vmem:[#allocation9 + $0x410] sm:$0xff]
    %v313 = vld [vmem:[#allocation9 + $0x418] sm:$0xff]
    %v314 = vld [vmem:[#allocation9 + $0x420] sm:$0xff]
    %v315 = vld [vmem:[#allocation9 + $0x428] sm:$0xff]
    %v316 = vld [vmem:[#allocation9 + $0x430] sm:$0xff]
    %v317 = vld [vmem:[#allocation9 + $0x438] sm:$0xff]
    %v318 = vld [vmem:[#allocation9 + $0x440] sm:$0xff]
    %v319 = vld [vmem:[#allocation9 + $0x448] sm:$0xff]
    %v320 = vld [vmem:[#allocation9 + $0x450] sm:$0xff]
    %v321 = vld [vmem:[#allocation9 + $0x458] sm:$0xff]
    %v322 = vld [vmem:[#allocation9 + $0x460] sm:$0xff]
    %v323 = vld [vmem:[#allocation9 + $0x468] sm:$0xff]
    %v324 = vld [vmem:[#allocation9 + $0x470] sm:$0xff]
    %v325 = vld [vmem:[#allocation9 + $0x478] sm:$0xff]
    %v326 = vld [vmem:[#allocation9 + $0x480] sm:$0xff]
    %v327 = vld [vmem:[#allocation9 + $0x488] sm:$0xff]
    %v328 = vld [vmem:[#allocation9 + $0x490] sm:$0xff]
    %v329 = vld [vmem:[#allocation9 + $0x498] sm:$0xff]
    %v330 = vld [vmem:[#allocation9 + $0x4a0] sm:$0xff]
    %v331 = vld [vmem:[#allocation9 + $0x4a8] sm:$0xff]
    %v332 = vld [vmem:[#allocation9 + $0x4b0] sm:$0xff]
    %v333 = vld [vmem:[#allocation9 + $0x4b8] sm:$0xff]
    %v334 = vld [vmem:[#allocation9 + $0x4c0] sm:$0xff]
    %v335 = vld [vmem:[#allocation9 + $0x4c8] sm:$0xff]
    %v336 = vld [vmem:[#allocation9 + $0x4d0] sm:$0xff]
    %v337 = vld [vmem:[#allocation9 + $0x4d8] sm:$0xff]
    %v338 = vld [vmem:[#allocation9 + $0x4e0] sm:$0xff]
    %v339 = vld [vmem:[#allocation9 + $0x4e8] sm:$0xff]
    %v340 = vld [vmem:[#allocation9 + $0x4f0] sm:$0xff]
    %v341 = vld [vmem:[#allocation9 + $0x4f8] sm:$0xff]
    %v342 = vld [vmem:[#allocation9 + $0x500] sm:$0xff]
    %v343 = vld [vmem:[#allocation9 + $0x508] sm:$0xff]
    %v344 = vld [vmem:[#allocation9 + $0x510] sm:$0xff]
    %v345 = vld [vmem:[#allocation9 + $0x518] sm:$0xff]
    %v346 = vld [vmem:[#allocation9 + $0x520] sm:$0xff]
    %v347 = vld [vmem:[#allocation9 + $0x528] sm:$0xff]
    %v348 = vld [vmem:[#allocation9 + $0x530] sm:$0xff]
    %v349 = vld [vmem:[#allocation9 + $0x538] sm:$0xff]
    %v350 = vld [vmem:[#allocation9 + $0x540] sm:$0xff]
    %v351 = vld [vmem:[#allocation9 + $0x548] sm:$0xff]
    %v352 = vld [vmem:[#allocation9 + $0x550] sm:$0xff]
    %v353 = vld [vmem:[#allocation9 + $0x558] sm:$0xff]
    %v354 = vld [vmem:[#allocation9 + $0x560] sm:$0xff]
    %v355 = vld [vmem:[#allocation9 + $0x568] sm:$0xff]
    %v356 = vld [vmem:[#allocation9 + $0x570] sm:$0xff]
    %v357 = vld [vmem:[#allocation9 + $0x578] sm:$0xff]
    %v358 = vld [vmem:[#allocation9 + $0x580] sm:$0xff]
    %v359 = vld [vmem:[#allocation9 + $0x588] sm:$0xff]
    %v360 = vld [vmem:[#allocation9 + $0x590] sm:$0xff]
    %v361 = vld [vmem:[#allocation9 + $0x598] sm:$0xff]
    %v362 = vld [vmem:[#allocation9 + $0x5a0] sm:$0xff]
    %v363 = vld [vmem:[#allocation9 + $0x5a8] sm:$0xff]
    %v364 = vld [vmem:[#allocation9 + $0x5b0] sm:$0xff]
    %v365 = vld [vmem:[#allocation9 + $0x5b8] sm:$0xff]
    %v366 = vld [vmem:[#allocation9 + $0x5c0] sm:$0xff]
    %v367 = vld [vmem:[#allocation9 + $0x5c8] sm:$0xff]
    %v368 = vld [vmem:[#allocation9 + $0x5d0] sm:$0xff]
    %v369 = vld [vmem:[#allocation9 + $0x5d8] sm:$0xff]
    %v370 = vld [vmem:[#allocation9 + $0x5e0] sm:$0xff]
    %v371 = vld [vmem:[#allocation9 + $0x5e8] sm:$0xff]
    %v372 = vld [vmem:[#allocation9 + $0x5f0] sm:$0xff]
    %v373 = vld [vmem:[#allocation9 + $0x5f8] sm:$0xff]
    %v374 = vld [vmem:[#allocation9 + $0x600] sm:$0xff]
    %v375 = vld [vmem:[#allocation9 + $0x608] sm:$0xff]
    %v376 = vld [vmem:[#allocation9 + $0x610] sm:$0xff]
    %v377 = vld [vmem:[#allocation9 + $0x618] sm:$0xff]
    %v378 = vld [vmem:[#allocation9 + $0x620] sm:$0xff]
    %v379 = vld [vmem:[#allocation9 + $0x628] sm:$0xff]
    %v380 = vld [vmem:[#allocation9 + $0x630] sm:$0xff]
    %v381 = vld [vmem:[#allocation9 + $0x638] sm:$0xff]
    %v382 = vld [vmem:[#allocation9 + $0x640] sm:$0xff]
    %v383 = vld [vmem:[#allocation9 + $0x648] sm:$0xff]
    %v384 = vld [vmem:[#allocation9 + $0x650] sm:$0xff]
    %v385 = vld [vmem:[#allocation9 + $0x658] sm:$0xff]
    %v386 = vld [vmem:[#allocation9 + $0x660] sm:$0xff]
    %v387 = vld [vmem:[#allocation9 + $0x668] sm:$0xff]
    %v388 = vld [vmem:[#allocation9 + $0x670] sm:$0xff]
    %v389 = vld [vmem:[#allocation9 + $0x678] sm:$0xff]
    %v390 = vld [vmem:[#allocation9 + $0x680] sm:$0xff]
    %v391 = vld [vmem:[#allocation9 + $0x688] sm:$0xff]
    %v392 = vld [vmem:[#allocation9 + $0x690] sm:$0xff]
    %v393 = vld [vmem:[#allocation9 + $0x698] sm:$0xff]
    %v394 = vld [vmem:[#allocation9 + $0x6a0] sm:$0xff]
    %v395 = vld [vmem:[#allocation9 + $0x6a8] sm:$0xff]
    %v396 = vld [vmem:[#allocation9 + $0x6b0] sm:$0xff]
    %v397 = vld [vmem:[#allocation9 + $0x6b8] sm:$0xff]
    %v398 = vld [vmem:[#allocation9 + $0x6c0] sm:$0xff]
    %v399 = vld [vmem:[#allocation9 + $0x6c8] sm:$0xff]
    %v400 = vld [vmem:[#allocation9 + $0x6d0] sm:$0xff]
    %v401 = vld [vmem:[#allocation9 + $0x6d8] sm:$0xff]
    %v402 = vld [vmem:[#allocation9 + $0x6e0] sm:$0xff]
    %v403 = vld [vmem:[#allocation9 + $0x6e8] sm:$0xff]
    %v404 = vld [vmem:[#allocation9 + $0x6f0] sm:$0xff]
    %v405 = vld [vmem:[#allocation9 + $0x6f8] sm:$0xff]
    %v406 = vld [vmem:[#allocation9 + $0x700] sm:$0xff]
    %v407 = vld [vmem:[#allocation9 + $0x708] sm:$0xff]
    %v408 = vld [vmem:[#allocation9 + $0x710] sm:$0xff]
    %v409 = vld [vmem:[#allocation9 + $0x718] sm:$0xff]
    %v410 = vld [vmem:[#allocation9 + $0x720] sm:$0xff]
    %v411 = vld [vmem:[#allocation9 + $0x728] sm:$0xff]
    %v412 = vld [vmem:[#allocation9 + $0x730] sm:$0xff]
    %v413 = vld [vmem:[#allocation9 + $0x738] sm:$0xff]
    %v414 = vld [vmem:[#allocation9 + $0x740] sm:$0xff]
    %v415 = vld [vmem:[#allocation9 + $0x748] sm:$0xff]
    %v416 = vld [vmem:[#allocation9 + $0x750] sm:$0xff]
    %v417 = vld [vmem:[#allocation9 + $0x758] sm:$0xff]
    %v418 = vld [vmem:[#allocation9 + $0x760] sm:$0xff]
    %v419 = vld [vmem:[#allocation9 + $0x768] sm:$0xff]
    %v420 = vld [vmem:[#allocation9 + $0x770] sm:$0xff]
    %v421 = vld [vmem:[#allocation9 + $0x778] sm:$0xff]
    %v422 = vld [vmem:[#allocation9 + $0x780] sm:$0xff]
    %v423 = vld [vmem:[#allocation9 + $0x788] sm:$0xff]
    %v424 = vld [vmem:[#allocation9 + $0x790] sm:$0xff]
    %v425 = vld [vmem:[#allocation9 + $0x798] sm:$0xff]
    %v426 = vld [vmem:[#allocation9 + $0x7a0] sm:$0xff]
    %v427 = vld [vmem:[#allocation9 + $0x7a8] sm:$0xff]
    %v428 = vld [vmem:[#allocation9 + $0x7b0] sm:$0xff]
    %v429 = vld [vmem:[#allocation9 + $0x7b8] sm:$0xff]
    %v430 = vld [vmem:[#allocation9 + $0x7c0] sm:$0xff]
    %v431 = vld [vmem:[#allocation9 + $0x7c8] sm:$0xff]
    %v432 = vld [vmem:[#allocation9 + $0x7d0] sm:$0xff]
    %v433 = vld [vmem:[#allocation9 + $0x7d8] sm:$0xff]
    %v434 = vld [vmem:[#allocation9 + $0x7e0] sm:$0xff]
    %v435 = vld [vmem:[#allocation9 + $0x7e8] sm:$0xff]
    %v436 = vld [vmem:[#allocation9 + $0x7f0] sm:$0xff]
    %v437 = vld [vmem:[#allocation9 + $0x7f8] sm:$0xff]
    %v438 = vld [vmem:[#allocation9 + $0x800] sm:$0xff]
    %v439 = vld [vmem:[#allocation9 + $0x808] sm:$0xff]
    %v440 = vld [vmem:[#allocation9 + $0x810] sm:$0xff]
    %v441 = vld [vmem:[#allocation9 + $0x818] sm:$0xff]
    %v442 = vld [vmem:[#allocation9 + $0x820] sm:$0xff]
    %v443 = vld [vmem:[#allocation9 + $0x828] sm:$0xff]
    %v444 = vld [vmem:[#allocation9 + $0x830] sm:$0xff]
    %v445 = vld [vmem:[#allocation9 + $0x838] sm:$0xff]
    %v446 = vld [vmem:[#allocation9 + $0x840] sm:$0xff]
    %v447 = vld [vmem:[#allocation9 + $0x848] sm:$0xff]
    %v448 = vld [vmem:[#allocation9 + $0x850] sm:$0xff]
    %v449 = vld [vmem:[#allocation9 + $0x858] sm:$0xff]
    %v450 = vld [vmem:[#allocation9 + $0x860] sm:$0xff]
    %v451 = vld [vmem:[#allocation9 + $0x868] sm:$0xff]
    %v452 = vld [vmem:[#allocation9 + $0x870] sm:$0xff]
    %v453 = vld [vmem:[#allocation9 + $0x878] sm:$0xff]
    %v454 = vld [vmem:[#allocation9 + $0x880] sm:$0xff]
    %v455 = vld [vmem:[#allocation9 + $0x888] sm:$0xff]
    %v456 = vld [vmem:[#allocation9 + $0x890] sm:$0xff]
    %v457 = vld [vmem:[#allocation9 + $0x898] sm:$0xff]
    %v458 = vld [vmem:[#allocation9 + $0x8a0] sm:$0xff]
    %v459 = vld [vmem:[#allocation9 + $0x8a8] sm:$0xff]
    %v460 = vld [vmem:[#allocation9 + $0x8b0] sm:$0xff]
    %v461 = vld [vmem:[#allocation9 + $0x8b8] sm:$0xff]
    %v462 = vld [vmem:[#allocation9 + $0x8c0] sm:$0xff]
    %v463 = vld [vmem:[#allocation9 + $0x8c8] sm:$0xff]
    %v464 = vld [vmem:[#allocation9 + $0x8d0] sm:$0xff]
    %v465 = vld [vmem:[#allocation9 + $0x8d8] sm:$0xff]
    %v466 = vld [vmem:[#allocation9 + $0x8e0] sm:$0xff]
    %v467 = vld [vmem:[#allocation9 + $0x8e8] sm:$0xff]
    %v468 = vld [vmem:[#allocation9 + $0x8f0] sm:$0xff]
    %v469 = vld [vmem:[#allocation9 + $0x8f8] sm:$0xff]
    %v470 = vld [vmem:[#allocation9 + $0x900] sm:$0xff]
    %v471 = vld [vmem:[#allocation9 + $0x908] sm:$0xff]
    %v472 = vld [vmem:[#allocation9 + $0x910] sm:$0xff]
    %v473 = vld [vmem:[#allocation9 + $0x918] sm:$0xff]
    %v474 = vld [vmem:[#allocation9 + $0x920] sm:$0xff]
    %v475 = vld [vmem:[#allocation9 + $0x928] sm:$0xff]
    %v476 = vld [vmem:[#allocation9 + $0x930] sm:$0xff]
    %v477 = vld [vmem:[#allocation9 + $0x938] sm:$0xff]
    %v478 = vld [vmem:[#allocation9 + $0x940] sm:$0xff]
    %v479 = vld [vmem:[#allocation9 + $0x948] sm:$0xff]
    %v480 = vld [vmem:[#allocation9 + $0x950] sm:$0xff]
    %v481 = vld [vmem:[#allocation9 + $0x958] sm:$0xff]
    %v482 = vld [vmem:[#allocation9 + $0x960] sm:$0xff]
    %v483 = vld [vmem:[#allocation9 + $0x968] sm:$0xff]
    %v484 = vld [vmem:[#allocation9 + $0x970] sm:$0xff]
    %v485 = vld [vmem:[#allocation9 + $0x978] sm:$0xff]
    %v486 = vld [vmem:[#allocation9 + $0x980] sm:$0xff]
    %v487 = vld [vmem:[#allocation9 + $0x988] sm:$0xff]
    %v488 = vld [vmem:[#allocation9 + $0x990] sm:$0xff]
    %v489 = vld [vmem:[#allocation9 + $0x998] sm:$0xff]
    %v490 = vld [vmem:[#allocation9 + $0x9a0] sm:$0xff]
    %v491 = vld [vmem:[#allocation9 + $0x9a8] sm:$0xff]
    %v492 = vld [vmem:[#allocation9 + $0x9b0] sm:$0xff]
    %v493 = vld [vmem:[#allocation9 + $0x9b8] sm:$0xff]
    %v494 = vld [vmem:[#allocation9 + $0x9c0] sm:$0xff]
    %v495 = vld [vmem:[#allocation9 + $0x9c8] sm:$0xff]
    %v496 = vld [vmem:[#allocation9 + $0x9d0] sm:$0xff]
    %v497 = vld [vmem:[#allocation9 + $0x9d8] sm:$0xff]
    %v498 = vld [vmem:[#allocation9 + $0x9e0] sm:$0xff]
    %v499 = vld [vmem:[#allocation9 + $0x9e8] sm:$0xff]
    %v500 = vld [vmem:[#allocation9 + $0x9f0] sm:$0xff]
    %v501 = vld [vmem:[#allocation9 + $0x9f8] sm:$0xff]
    %v502 = vld [vmem:[#allocation9 + $0xa00] sm:$0xff]
    %v503 = vld [vmem:[#allocation9 + $0xa08] sm:$0xff]
    %v504 = vld [vmem:[#allocation9 + $0xa10] sm:$0xff]
    %v505 = vld [vmem:[#allocation9 + $0xa18] sm:$0xff]
    %v506 = vld [vmem:[#allocation9 + $0xa20] sm:$0xff]
    %v507 = vld [vmem:[#allocation9 + $0xa28] sm:$0xff]
    %v508 = vld [vmem:[#allocation9 + $0xa30] sm:$0xff]
    %v509 = vld [vmem:[#allocation9 + $0xa38] sm:$0xff]
    %v510 = vld [vmem:[#allocation9 + $0xa40] sm:$0xff]
    %v511 = vld [vmem:[#allocation9 + $0xa48] sm:$0xff]
    %v512 = vld [vmem:[#allocation9 + $0xa50] sm:$0xff]
    %v513 = vld [vmem:[#allocation9 + $0xa58] sm:$0xff]
    %v514 = vld [vmem:[#allocation9 + $0xa60] sm:$0xff]
    %v515 = vld [vmem:[#allocation9 + $0xa68] sm:$0xff]
    %v516 = vld [vmem:[#allocation9 + $0xa70] sm:$0xff]
    %v517 = vld [vmem:[#allocation9 + $0xa78] sm:$0xff]
    %v518 = vld [vmem:[#allocation9 + $0xa80] sm:$0xff]
    %v519 = vld [vmem:[#allocation9 + $0xa88] sm:$0xff]
    %v520 = vld [vmem:[#allocation9 + $0xa90] sm:$0xff]
    %v521 = vld [vmem:[#allocation9 + $0xa98] sm:$0xff]
    %v522 = vld [vmem:[#allocation9 + $0xaa0] sm:$0xff]
    %v523 = vld [vmem:[#allocation9 + $0xaa8] sm:$0xff]
    %v524 = vld [vmem:[#allocation9 + $0xab0] sm:$0xff]
    %v525 = vld [vmem:[#allocation9 + $0xab8] sm:$0xff]
    %v526 = vld [vmem:[#allocation9 + $0xac0] sm:$0xff]
    %v527 = vld [vmem:[#allocation9 + $0xac8] sm:$0xff]
    %v528 = vld [vmem:[#allocation9 + $0xad0] sm:$0xff]
    %v529 = vld [vmem:[#allocation9 + $0xad8] sm:$0xff]
    %v530 = vld [vmem:[#allocation9 + $0xae0] sm:$0xff]
    %v531 = vld [vmem:[#allocation9 + $0xae8] sm:$0xff]
    %v532 = vld [vmem:[#allocation9 + $0xaf0] sm:$0xff]
    %v533 = vld [vmem:[#allocation9 + $0xaf8] sm:$0xff]
    %v534 = vld [vmem:[#allocation9 + $0xb00] sm:$0xff]
    %v535 = vld [vmem:[#allocation9 + $0xb08] sm:$0xff]
    %v536 = vld [vmem:[#allocation9 + $0xb10] sm:$0xff]
    %v537 = vld [vmem:[#allocation9 + $0xb18] sm:$0xff]
    %v538 = vld [vmem:[#allocation9 + $0xb20] sm:$0xff]
    %v539 = vld [vmem:[#allocation9 + $0xb28] sm:$0xff]
    %v540 = vld [vmem:[#allocation9 + $0xb30] sm:$0xff]
    %v541 = vld [vmem:[#allocation9 + $0xb38] sm:$0xff]
    %v542 = vld [vmem:[#allocation9 + $0xb40] sm:$0xff]
    %v543 = vld [vmem:[#allocation9 + $0xb48] sm:$0xff]
    %v544 = vld [vmem:[#allocation9 + $0xb50] sm:$0xff]
    %v545 = vld [vmem:[#allocation9 + $0xb58] sm:$0xff]
    %v546 = vld [vmem:[#allocation9 + $0xb60] sm:$0xff]
    %v547 = vld [vmem:[#allocation9 + $0xb68] sm:$0xff]
    %v548 = vld [vmem:[#allocation9 + $0xb70] sm:$0xff]
    %v549 = vld [vmem:[#allocation9 + $0xb78] sm:$0xff]
    %v550 = vld [vmem:[#allocation9 + $0xb80] sm:$0xff]
    %v551 = vld [vmem:[#allocation9 + $0xb88] sm:$0xff]
    %v552 = vld [vmem:[#allocation9 + $0xb90] sm:$0xff]
    %v553 = vld [vmem:[#allocation9 + $0xb98] sm:$0xff]
    %v554 = vld [vmem:[#allocation9 + $0xba0] sm:$0xff]
    %v555 = vld [vmem:[#allocation9 + $0xba8] sm:$0xff]
    %v556 = vld [vmem:[#allocation9 + $0xbb0] sm:$0xff]
    %v557 = vld [vmem:[#allocation9 + $0xbb8] sm:$0xff]
    %v558 = vld [vmem:[#allocation9 + $0xbc0] sm:$0xff]
    %v559 = vld [vmem:[#allocation9 + $0xbc8] sm:$0xff]
    %v560 = vld [vmem:[#allocation9 + $0xbd0] sm:$0xff]
    %v561 = vld [vmem:[#allocation9 + $0xbd8] sm:$0xff]
    %v562 = vld [vmem:[#allocation9 + $0xbe0] sm:$0xff]
    %v563 = vld [vmem:[#allocation9 + $0xbe8] sm:$0xff]
    %v564 = vld [vmem:[#allocation9 + $0xbf0] sm:$0xff]
    %v565 = vld [vmem:[#allocation9 + $0xbf8] sm:$0xff]
    %566 = vmatprep.subr.mxu0 %v228
    %567 = vmatpush1.msra.mxu0 %v227
    %568 = vmatprep.subr.mxu0 %v225
    %569 = vmatpush1.msra.mxu0 %v224
    %570 = vmatprep.subr.mxu0 %v222
    %571 = vmatpush1.msra.mxu0 %v221
    %572 = vmatprep.subr.mxu0 %v219
    %573 = vmatpush1.msra.mxu0 %v218
    %574 = vmatprep.subr.mxu0 %v216
    %575 = vmatpush1.msra.mxu0 %v215
    %576 = vmatprep.subr.mxu0 %v213
    %577 = vmatpush1.msra.mxu0 %v212
    %578 = vmatprep.subr.mxu0 %v210
    %579 = vmatpush1.msra.mxu0 %v209
    %580 = vmatprep.subr.mxu0 %v207
    %581 = vmatpush1.msra.mxu0 %v206
    %582 = vmatprep.subr.mxu0 %v204
    %583 = vmatpush1.msra.mxu0 %v203
    %584 = vmatprep.subr.mxu0 %v201
    %585 = vmatpush1.msra.mxu0 %v200
    %586 = vmatprep.subr.mxu0 %v198
    %587 = vmatpush1.msra.mxu0 %v197
    %588 = vmatprep.subr.mxu0 %v195
    %589 = vmatpush1.msra.mxu0 %v194
    %590 = vmatprep.subr.mxu0 %v192
    %591 = vmatpush1.msra.mxu0 %v191
    %592 = vmatprep.subr.mxu0 %v189
    %593 = vmatpush1.msra.mxu0 %v188
    %594 = vmatprep.subr.mxu0 %v186
    %595 = vmatpush1.msra.mxu0 %v185
    %596 = vmatprep.subr.mxu0 %v183
    %597 = vmatpush1.msra.mxu0 %v182
    %598 = vmatprep.subr.mxu0 %v276
    %599 = vmatpush2.msra.mxu0 %v275
    %600 = vmatprep.subr.mxu0 %v273
    %601 = vmatpush2.msra.mxu0 %v272
    %602 = vmatprep.subr.mxu0 %v270
    %603 = vmatpush2.msra.mxu0 %v269
    %604 = vmatprep.subr.mxu0 %v267
    %605 = vmatpush2.msra.mxu0 %v266
    %606 = vmatprep.subr.mxu0 %v264
    %607 = vmatpush2.msra.mxu0 %v263
    %608 = vmatprep.subr.mxu0 %v261
    %609 = vmatpush2.msra.mxu0 %v260
    %610 = vmatprep.subr.mxu0 %v258
    %611 = vmatpush2.msra.mxu0 %v257
    %612 = vmatprep.subr.mxu0 %v255
    %613 = vmatpush2.msra.mxu0 %v254
    %614 = vmatprep.subr.mxu0 %v252
    %615 = vmatpush2.msra.mxu0 %v251
    %616 = vmatprep.subr.mxu0 %v249
    %617 = vmatpush2.msra.mxu0 %v248
    %618 = vmatprep.subr.mxu0 %v246
    %619 = vmatpush2.msra.mxu0 %v245
    %620 = vmatprep.subr.mxu0 %v243
    %621 = vmatpush2.msra.mxu0 %v242
    %622 = vmatprep.subr.mxu0 %v240
    %623 = vmatpush2.msra.mxu0 %v239
    %624 = vmatprep.subr.mxu0 %v237
    %625 = vmatpush2.msra.mxu0 %v236
    %626 = vmatprep.subr.mxu0 %v234
    %627 = vmatpush2.msra.mxu0 %v233
    %628 = vmatprep.subr.mxu0 %v231
    %629 = vmatpush2.msra.mxu0 %v230
    %630 = vmatprep.mubr.f32.mxu0 %v159
    %631 = vmatmul.mubr.f32.gmra.mxu0 %v158
    %v632 = vpop.f32.mrf.mxu0
    %v633 = vadd.f32 0.0, %v632
    %v634 = vpop.f32.mrf.mxu0
    %v635 = vadd.f32 0.0, %v634
    %636 = vmatprep.mubr.f32.mxu0 %v167
    %637 = vmatmul.mubr.f32.gmra.mxu0 %v166
    %v638 = vpop.f32.mrf.mxu0
    %v639 = vadd.f32 0.0, %v638
    %v640 = vpop.f32.mrf.mxu0
    %v641 = vadd.f32 0.0, %v640
    %642 = vmatprep.mubr.f32.mxu0 %v175
    %643 = vmatmul.mubr.f32.gmra.mxu0 %v174
    %v644 = vpop.f32.mrf.mxu0
    %v645 = vadd.f32 0.0, %v644
    %v646 = vpop.f32.mrf.mxu0
    %v647 = vadd.f32 0.0, %v646
    %648 = vdwg.mxu0
    %649 = vmatprep.subr.mxu0 %v324
    %650 = vmatpush1.msra.mxu0 %v323
    %651 = vmatprep.subr.mxu0 %v321
    %652 = vmatpush1.msra.mxu0 %v320
    %653 = vmatprep.subr.mxu0 %v318
    %654 = vmatpush1.msra.mxu0 %v317
    %655 = vmatprep.subr.mxu0 %v315
    %656 = vmatpush1.msra.mxu0 %v314
    %657 = vmatprep.subr.mxu0 %v312
    %658 = vmatpush1.msra.mxu0 %v311
    %659 = vmatprep.subr.mxu0 %v309
    %660 = vmatpush1.msra.mxu0 %v308
    %661 = vmatprep.subr.mxu0 %v306
    %662 = vmatpush1.msra.mxu0 %v305
    %663 = vmatprep.subr.mxu0 %v303
    %664 = vmatpush1.msra.mxu0 %v302
    %665 = vmatprep.subr.mxu0 %v300
    %666 = vmatpush1.msra.mxu0 %v299
    %667 = vmatprep.subr.mxu0 %v297
    %668 = vmatpush1.msra.mxu0 %v296
    %669 = vmatprep.subr.mxu0 %v294
    %670 = vmatpush1.msra.mxu0 %v293
    %671 = vmatprep.subr.mxu0 %v291
    %672 = vmatpush1.msra.mxu0 %v290
    %673 = vmatprep.subr.mxu0 %v288
    %674 = vmatpush1.msra.mxu0 %v287
    %675 = vmatprep.subr.mxu0 %v285
    %676 = vmatpush1.msra.mxu0 %v284
    %677 = vmatprep.subr.mxu0 %v282
    %678 = vmatpush1.msra.mxu0 %v281
    %679 = vmatprep.subr.mxu0 %v279
    %680 = vmatpush1.msra.mxu0 %v278
    %681 = vmatprep.subr.mxu0 %v372
    %682 = vmatpush2.msra.mxu0 %v371
    %683 = vmatprep.subr.mxu0 %v369
    %684 = vmatpush2.msra.mxu0 %v368
    %685 = vmatprep.subr.mxu0 %v366
    %686 = vmatpush2.msra.mxu0 %v365
    %687 = vmatprep.subr.mxu0 %v363
    %688 = vmatpush2.msra.mxu0 %v362
    %689 = vmatprep.subr.mxu0 %v360
    %690 = vmatpush2.msra.mxu0 %v359
    %691 = vmatprep.subr.mxu0 %v357
    %692 = vmatpush2.msra.mxu0 %v356
    %693 = vmatprep.subr.mxu0 %v354
    %694 = vmatpush2.msra.mxu0 %v353
    %695 = vmatprep.subr.mxu0 %v351
    %696 = vmatpush2.msra.mxu0 %v350
    %697 = vmatprep.subr.mxu0 %v348
    %698 = vmatpush2.msra.mxu0 %v347
    %699 = vmatprep.subr.mxu0 %v345
    %700 = vmatpush2.msra.mxu0 %v344
    %701 = vmatprep.subr.mxu0 %v342
    %702 = vmatpush2.msra.mxu0 %v341
    %703 = vmatprep.subr.mxu0 %v339
    %704 = vmatpush2.msra.mxu0 %v338
    %705 = vmatprep.subr.mxu0 %v336
    %706 = vmatpush2.msra.mxu0 %v335
    %707 = vmatprep.subr.mxu0 %v333
    %708 = vmatpush2.msra.mxu0 %v332
    %709 = vmatprep.subr.mxu0 %v330
    %710 = vmatpush2.msra.mxu0 %v329
    %711 = vmatprep.subr.mxu0 %v327
    %712 = vmatpush2.msra.mxu0 %v326
    %713 = vmatprep.mubr.f32.mxu0 %v161
    %714 = vmatmul.mubr.f32.gmra.mxu0 %v160
    %v715 = vpop.f32.mrf.mxu0
    %v716 = vadd.f32 %v633, %v715
    %v717 = vpop.f32.mrf.mxu0
    %v718 = vadd.f32 %v635, %v717
    %719 = vmatprep.mubr.f32.mxu0 %v169
    %720 = vmatmul.mubr.f32.gmra.mxu0 %v168
    %v721 = vpop.f32.mrf.mxu0
    %v722 = vadd.f32 %v639, %v721
    %v723 = vpop.f32.mrf.mxu0
    %v724 = vadd.f32 %v641, %v723
    %725 = vmatprep.mubr.f32.mxu0 %v177
    %726 = vmatmul.mubr.f32.gmra.mxu0 %v176
    %v727 = vpop.f32.mrf.mxu0
    %v728 = vadd.f32 %v645, %v727
    %v729 = vpop.f32.mrf.mxu0
    %v730 = vadd.f32 %v647, %v729
    %731 = vdwg.mxu0
    %732 = vmatprep.subr.mxu0 %v420
    %733 = vmatpush1.msra.mxu0 %v419
    %734 = vmatprep.subr.mxu0 %v417
    %735 = vmatpush1.msra.mxu0 %v416
    %736 = vmatprep.subr.mxu0 %v414
    %737 = vmatpush1.msra.mxu0 %v413
    %738 = vmatprep.subr.mxu0 %v411
    %739 = vmatpush1.msra.mxu0 %v410
    %740 = vmatprep.subr.mxu0 %v408
    %741 = vmatpush1.msra.mxu0 %v407
    %742 = vmatprep.subr.mxu0 %v405
    %743 = vmatpush1.msra.mxu0 %v404
    %744 = vmatprep.subr.mxu0 %v402
    %745 = vmatpush1.msra.mxu0 %v401
    %746 = vmatprep.subr.mxu0 %v399
    %747 = vmatpush1.msra.mxu0 %v398
    %748 = vmatprep.subr.mxu0 %v396
    %749 = vmatpush1.msra.mxu0 %v395
    %750 = vmatprep.subr.mxu0 %v393
    %751 = vmatpush1.msra.mxu0 %v392
    %752 = vmatprep.subr.mxu0 %v390
    %753 = vmatpush1.msra.mxu0 %v389
    %754 = vmatprep.subr.mxu0 %v387
    %755 = vmatpush1.msra.mxu0 %v386
    %756 = vmatprep.subr.mxu0 %v384
    %757 = vmatpush1.msra.mxu0 %v383
    %758 = vmatprep.subr.mxu0 %v381
    %759 = vmatpush1.msra.mxu0 %v380
    %760 = vmatprep.subr.mxu0 %v378
    %761 = vmatpush1.msra.mxu0 %v377
    %762 = vmatprep.subr.mxu0 %v375
    %763 = vmatpush1.msra.mxu0 %v374
    %764 = vmatprep.subr.mxu0 %v468
    %765 = vmatpush2.msra.mxu0 %v467
    %766 = vmatprep.subr.mxu0 %v465
    %767 = vmatpush2.msra.mxu0 %v464
    %768 = vmatprep.subr.mxu0 %v462
    %769 = vmatpush2.msra.mxu0 %v461
    %770 = vmatprep.subr.mxu0 %v459
    %771 = vmatpush2.msra.mxu0 %v458
    %772 = vmatprep.subr.mxu0 %v456
    %773 = vmatpush2.msra.mxu0 %v455
    %774 = vmatprep.subr.mxu0 %v453
    %775 = vmatpush2.msra.mxu0 %v452
    %776 = vmatprep.subr.mxu0 %v450
    %777 = vmatpush2.msra.mxu0 %v449
    %778 = vmatprep.subr.mxu0 %v447
    %779 = vmatpush2.msra.mxu0 %v446
    %780 = vmatprep.subr.mxu0 %v444
    %781 = vmatpush2.msra.mxu0 %v443
    %782 = vmatprep.subr.mxu0 %v441
    %783 = vmatpush2.msra.mxu0 %v440
    %784 = vmatprep.subr.mxu0 %v438
    %785 = vmatpush2.msra.mxu0 %v437
    %786 = vmatprep.subr.mxu0 %v435
    %787 = vmatpush2.msra.mxu0 %v434
    %788 = vmatprep.subr.mxu0 %v432
    %789 = vmatpush2.msra.mxu0 %v431
    %790 = vmatprep.subr.mxu0 %v429
    %791 = vmatpush2.msra.mxu0 %v428
    %792 = vmatprep.subr.mxu0 %v426
    %793 = vmatpush2.msra.mxu0 %v425
    %794 = vmatprep.subr.mxu0 %v423
    %795 = vmatpush2.msra.mxu0 %v422
    %796 = vmatprep.mubr.f32.mxu0 %v163
    %797 = vmatmul.mubr.f32.gmra.mxu0 %v162
    %v798 = vpop.f32.mrf.mxu0
    %v799 = vadd.f32 %v716, %v798
    %v800 = vpop.f32.mrf.mxu0
    %v801 = vadd.f32 %v718, %v800
    %802 = vmatprep.mubr.f32.mxu0 %v171
    %803 = vmatmul.mubr.f32.gmra.mxu0 %v170
    %v804 = vpop.f32.mrf.mxu0
    %v805 = vadd.f32 %v722, %v804
    %v806 = vpop.f32.mrf.mxu0
    %v807 = vadd.f32 %v724, %v806
    %808 = vmatprep.mubr.f32.mxu0 %v179
    %809 = vmatmul.mubr.f32.gmra.mxu0 %v178
    %v810 = vpop.f32.mrf.mxu0
    %v811 = vadd.f32 %v728, %v810
    %v812 = vpop.f32.mrf.mxu0
    %v813 = vadd.f32 %v730, %v812
    %814 = vdwg.mxu0
    %815 = vmatprep.subr.mxu0 %v516
    %816 = vmatpush1.msra.mxu0 %v515
    %817 = vmatprep.subr.mxu0 %v513
    %818 = vmatpush1.msra.mxu0 %v512
    %819 = vmatprep.subr.mxu0 %v510
    %820 = vmatpush1.msra.mxu0 %v509
    %821 = vmatprep.subr.mxu0 %v507
    %822 = vmatpush1.msra.mxu0 %v506
    %823 = vmatprep.subr.mxu0 %v504
    %824 = vmatpush1.msra.mxu0 %v503
    %825 = vmatprep.subr.mxu0 %v501
    %826 = vmatpush1.msra.mxu0 %v500
    %827 = vmatprep.subr.mxu0 %v498
    %828 = vmatpush1.msra.mxu0 %v497
    %829 = vmatprep.subr.mxu0 %v495
    %830 = vmatpush1.msra.mxu0 %v494
    %831 = vmatprep.subr.mxu0 %v492
    %832 = vmatpush1.msra.mxu0 %v491
    %833 = vmatprep.subr.mxu0 %v489
    %834 = vmatpush1.msra.mxu0 %v488
    %835 = vmatprep.subr.mxu0 %v486
    %836 = vmatpush1.msra.mxu0 %v485
    %837 = vmatprep.subr.mxu0 %v483
    %838 = vmatpush1.msra.mxu0 %v482
    %839 = vmatprep.subr.mxu0 %v480
    %840 = vmatpush1.msra.mxu0 %v479
    %841 = vmatprep.subr.mxu0 %v477
    %842 = vmatpush1.msra.mxu0 %v476
    %843 = vmatprep.subr.mxu0 %v474
    %844 = vmatpush1.msra.mxu0 %v473
    %845 = vmatprep.subr.mxu0 %v471
    %846 = vmatpush1.msra.mxu0 %v470
    %847 = vmatprep.subr.mxu0 %v564
    %848 = vmatpush2.msra.mxu0 %v563
    %849 = vmatprep.subr.mxu0 %v561
    %850 = vmatpush2.msra.mxu0 %v560
    %851 = vmatprep.subr.mxu0 %v558
    %852 = vmatpush2.msra.mxu0 %v557
    %853 = vmatprep.subr.mxu0 %v555
    %854 = vmatpush2.msra.mxu0 %v554
    %855 = vmatprep.subr.mxu0 %v552
    %856 = vmatpush2.msra.mxu0 %v551
    %857 = vmatprep.subr.mxu0 %v549
    %858 = vmatpush2.msra.mxu0 %v548
    %859 = vmatprep.subr.mxu0 %v546
    %860 = vmatpush2.msra.mxu0 %v545
    %861 = vmatprep.subr.mxu0 %v543
    %862 = vmatpush2.msra.mxu0 %v542
    %863 = vmatprep.subr.mxu0 %v540
    %864 = vmatpush2.msra.mxu0 %v539
    %865 = vmatprep.subr.mxu0 %v537
    %866 = vmatpush2.msra.mxu0 %v536
    %867 = vmatprep.subr.mxu0 %v534
    %868 = vmatpush2.msra.mxu0 %v533
    %869 = vmatprep.subr.mxu0 %v531
    %870 = vmatpush2.msra.mxu0 %v530
    %871 = vmatprep.subr.mxu0 %v528
    %872 = vmatpush2.msra.mxu0 %v527
    %873 = vmatprep.subr.mxu0 %v525
    %874 = vmatpush2.msra.mxu0 %v524
    %875 = vmatprep.subr.mxu0 %v522
    %876 = vmatpush2.msra.mxu0 %v521
    %877 = vmatprep.subr.mxu0 %v519
    %878 = vmatpush2.msra.mxu0 %v518
    %879 = vmatprep.mubr.f32.mxu0 %v165
    %880 = vmatmul.mubr.f32.gmra.mxu0 %v164
    %v881 = vpop.f32.mrf.mxu0
    %v882 = vadd.f32 %v799, %v881
    %v883 = vpop.f32.mrf.mxu0
    %v884 = vadd.f32 %v801, %v883
    %885 = vmatprep.mubr.f32.mxu0 %v173
    %886 = vmatmul.mubr.f32.gmra.mxu0 %v172
    %v887 = vpop.f32.mrf.mxu0
    %v888 = vadd.f32 %v805, %v887
    %v889 = vpop.f32.mrf.mxu0
    %v890 = vadd.f32 %v807, %v889
    %891 = vmatprep.mubr.f32.mxu0 %v181
    %892 = vmatmul.mubr.f32.gmra.mxu0 %v180
    %v893 = vpop.f32.mrf.mxu0
    %v894 = vadd.f32 %v811, %v893
    %v895 = vpop.f32.mrf.mxu0
    %v896 = vadd.f32 %v813, %v895
    %897 = vdwg.mxu0
    %898 = vmatprep.subr.mxu0 0.0
    %899 = vmatpush1.msra.mxu0 %v229
    %900 = vmatprep.subr.mxu0 0.0
    %901 = vmatpush1.msra.mxu0 %v226
    %902 = vmatprep.subr.mxu0 0.0
    %903 = vmatpush1.msra.mxu0 %v223
    %904 = vmatprep.subr.mxu0 0.0
    %905 = vmatpush1.msra.mxu0 %v220
    %906 = vmatprep.subr.mxu0 0.0
    %907 = vmatpush1.msra.mxu0 %v217
    %908 = vmatprep.subr.mxu0 0.0
    %909 = vmatpush1.msra.mxu0 %v214
    %910 = vmatprep.subr.mxu0 0.0
    %911 = vmatpush1.msra.mxu0 %v211
    %912 = vmatprep.subr.mxu0 0.0
    %913 = vmatpush1.msra.mxu0 %v208
    %914 = vmatprep.subr.mxu0 0.0
    %915 = vmatpush1.msra.mxu0 %v205
    %916 = vmatprep.subr.mxu0 0.0
    %917 = vmatpush1.msra.mxu0 %v202
    %918 = vmatprep.subr.mxu0 0.0
    %919 = vmatpush1.msra.mxu0 %v199
    %920 = vmatprep.subr.mxu0 0.0
    %921 = vmatpush1.msra.mxu0 %v196
    %922 = vmatprep.subr.mxu0 0.0
    %923 = vmatpush1.msra.mxu0 %v193
    %924 = vmatprep.subr.mxu0 0.0
    %925 = vmatpush1.msra.mxu0 %v190
    %926 = vmatprep.subr.mxu0 0.0
    %927 = vmatpush1.msra.mxu0 %v187
    %928 = vmatprep.subr.mxu0 0.0
    %929 = vmatpush1.msra.mxu0 %v184
    %930 = vmatprep.subr.mxu0 0.0
    %931 = vmatpush2.msra.mxu0 %v277
    %932 = vmatprep.subr.mxu0 0.0
    %933 = vmatpush2.msra.mxu0 %v274
    %934 = vmatprep.subr.mxu0 0.0
    %935 = vmatpush2.msra.mxu0 %v271
    %936 = vmatprep.subr.mxu0 0.0
    %937 = vmatpush2.msra.mxu0 %v268
    %938 = vmatprep.subr.mxu0 0.0
    %939 = vmatpush2.msra.mxu0 %v265
    %940 = vmatprep.subr.mxu0 0.0
    %941 = vmatpush2.msra.mxu0 %v262
    %942 = vmatprep.subr.mxu0 0.0
    %943 = vmatpush2.msra.mxu0 %v259
    %944 = vmatprep.subr.mxu0 0.0
    %945 = vmatpush2.msra.mxu0 %v256
    %946 = vmatprep.subr.mxu0 0.0
    %947 = vmatpush2.msra.mxu0 %v253
    %948 = vmatprep.subr.mxu0 0.0
    %949 = vmatpush2.msra.mxu0 %v250
    %950 = vmatprep.subr.mxu0 0.0
    %951 = vmatpush2.msra.mxu0 %v247
    %952 = vmatprep.subr.mxu0 0.0
    %953 = vmatpush2.msra.mxu0 %v244
    %954 = vmatprep.subr.mxu0 0.0
    %955 = vmatpush2.msra.mxu0 %v241
    %956 = vmatprep.subr.mxu0 0.0
    %957 = vmatpush2.msra.mxu0 %v238
    %958 = vmatprep.subr.mxu0 0.0
    %959 = vmatpush2.msra.mxu0 %v235
    %960 = vmatprep.subr.mxu0 0.0
    %961 = vmatpush2.msra.mxu0 %v232
    %962 = vmatprep.mubr.f32.mxu0 %v159
    %963 = vmatmul.mubr.f32.gmra.mxu0 %v158
    %v964 = vpop.f32.mrf.mxu0
    %v965 = vadd.f32 0.0, %v964
    %v966 = vpop.f32.mrf.mxu0
    %967 = vmatprep.mubr.f32.mxu0 %v167
    %968 = vmatmul.mubr.f32.gmra.mxu0 %v166
    %v969 = vpop.f32.mrf.mxu0
    %v970 = vadd.f32 0.0, %v969
    %v971 = vpop.f32.mrf.mxu0
    %972 = vmatprep.mubr.f32.mxu0 %v175
    %973 = vmatmul.mubr.f32.gmra.mxu0 %v174
    %v974 = vpop.f32.mrf.mxu0
    %v975 = vadd.f32 0.0, %v974
    %v976 = vpop.f32.mrf.mxu0
    %977 = vdwg.mxu0
    %978 = vmatprep.subr.mxu0 0.0
    %979 = vmatpush1.msra.mxu0 %v325
    %980 = vmatprep.subr.mxu0 0.0
    %981 = vmatpush1.msra.mxu0 %v322
    %982 = vmatprep.subr.mxu0 0.0
    %983 = vmatpush1.msra.mxu0 %v319
    %984 = vmatprep.subr.mxu0 0.0
    %985 = vmatpush1.msra.mxu0 %v316
    %986 = vmatprep.subr.mxu0 0.0
    %987 = vmatpush1.msra.mxu0 %v313
    %988 = vmatprep.subr.mxu0 0.0
    %989 = vmatpush1.msra.mxu0 %v310
    %990 = vmatprep.subr.mxu0 0.0
    %991 = vmatpush1.msra.mxu0 %v307
    %992 = vmatprep.subr.mxu0 0.0
    %993 = vmatpush1.msra.mxu0 %v304
    %994 = vmatprep.subr.mxu0 0.0
    %995 = vmatpush1.msra.mxu0 %v301
    %996 = vmatprep.subr.mxu0 0.0
    %997 = vmatpush1.msra.mxu0 %v298
    %998 = vmatprep.subr.mxu0 0.0
    %999 = vmatpush1.msra.mxu0 %v295
    %1000 = vmatprep.subr.mxu0 0.0
    %1001 = vmatpush1.msra.mxu0 %v292
    %1002 = vmatprep.subr.mxu0 0.0
    %1003 = vmatpush1.msra.mxu0 %v289
    %1004 = vmatprep.subr.mxu0 0.0
    %1005 = vmatpush1.msra.mxu0 %v286
    %1006 = vmatprep.subr.mxu0 0.0
    %1007 = vmatpush1.msra.mxu0 %v283
    %1008 = vmatprep.subr.mxu0 0.0
    %1009 = vmatpush1.msra.mxu0 %v280
    %1010 = vmatprep.subr.mxu0 0.0
    %1011 = vmatpush2.msra.mxu0 %v373
    %1012 = vmatprep.subr.mxu0 0.0
    %1013 = vmatpush2.msra.mxu0 %v370
    %1014 = vmatprep.subr.mxu0 0.0
    %1015 = vmatpush2.msra.mxu0 %v367
    %1016 = vmatprep.subr.mxu0 0.0
    %1017 = vmatpush2.msra.mxu0 %v364
    %1018 = vmatprep.subr.mxu0 0.0
    %1019 = vmatpush2.msra.mxu0 %v361
    %1020 = vmatprep.subr.mxu0 0.0
    %1021 = vmatpush2.msra.mxu0 %v358
    %1022 = vmatprep.subr.mxu0 0.0
    %1023 = vmatpush2.msra.mxu0 %v355
    %1024 = vmatprep.subr.mxu0 0.0
    %1025 = vmatpush2.msra.mxu0 %v352
    %1026 = vmatprep.subr.mxu0 0.0
    %1027 = vmatpush2.msra.mxu0 %v349
    %1028 = vmatprep.subr.mxu0 0.0
    %1029 = vmatpush2.msra.mxu0 %v346
    %1030 = vmatprep.subr.mxu0 0.0
    %1031 = vmatpush2.msra.mxu0 %v343
    %1032 = vmatprep.subr.mxu0 0.0
    %1033 = vmatpush2.msra.mxu0 %v340
    %1034 = vmatprep.subr.mxu0 0.0
    %1035 = vmatpush2.msra.mxu0 %v337
    %1036 = vmatprep.subr.mxu0 0.0
    %1037 = vmatpush2.msra.mxu0 %v334
    %1038 = vmatprep.subr.mxu0 0.0
    %1039 = vmatpush2.msra.mxu0 %v331
    %1040 = vmatprep.subr.mxu0 0.0
    %1041 = vmatpush2.msra.mxu0 %v328
    %1042 = vmatprep.mubr.f32.mxu0 %v161
    %1043 = vmatmul.mubr.f32.gmra.mxu0 %v160
    %v1044 = vpop.f32.mrf.mxu0
    %v1045 = vadd.f32 %v965, %v1044
    %v1046 = vpop.f32.mrf.mxu0
    %1047 = vmatprep.mubr.f32.mxu0 %v169
    %1048 = vmatmul.mubr.f32.gmra.mxu0 %v168
    %v1049 = vpop.f32.mrf.mxu0
    %v1050 = vadd.f32 %v970, %v1049
    %v1051 = vpop.f32.mrf.mxu0
    %1052 = vmatprep.mubr.f32.mxu0 %v177
    %1053 = vmatmul.mubr.f32.gmra.mxu0 %v176
    %v1054 = vpop.f32.mrf.mxu0
    %v1055 = vadd.f32 %v975, %v1054
    %v1056 = vpop.f32.mrf.mxu0
    %1057 = vdwg.mxu0
    %1058 = vmatprep.subr.mxu0 0.0
    %1059 = vmatpush1.msra.mxu0 %v421
    %1060 = vmatprep.subr.mxu0 0.0
    %1061 = vmatpush1.msra.mxu0 %v418
    %1062 = vmatprep.subr.mxu0 0.0
    %1063 = vmatpush1.msra.mxu0 %v415
    %1064 = vmatprep.subr.mxu0 0.0
    %1065 = vmatpush1.msra.mxu0 %v412
    %1066 = vmatprep.subr.mxu0 0.0
    %1067 = vmatpush1.msra.mxu0 %v409
    %1068 = vmatprep.subr.mxu0 0.0
    %1069 = vmatpush1.msra.mxu0 %v406
    %1070 = vmatprep.subr.mxu0 0.0
    %1071 = vmatpush1.msra.mxu0 %v403
    %1072 = vmatprep.subr.mxu0 0.0
    %1073 = vmatpush1.msra.mxu0 %v400
    %1074 = vmatprep.subr.mxu0 0.0
    %1075 = vmatpush1.msra.mxu0 %v397
    %1076 = vmatprep.subr.mxu0 0.0
    %1077 = vmatpush1.msra.mxu0 %v394
    %1078 = vmatprep.subr.mxu0 0.0
    %1079 = vmatpush1.msra.mxu0 %v391
    %1080 = vmatprep.subr.mxu0 0.0
    %1081 = vmatpush1.msra.mxu0 %v388
    %1082 = vmatprep.subr.mxu0 0.0
    %1083 = vmatpush1.msra.mxu0 %v385
    %1084 = vmatprep.subr.mxu0 0.0
    %1085 = vmatpush1.msra.mxu0 %v382
    %1086 = vmatprep.subr.mxu0 0.0
    %1087 = vmatpush1.msra.mxu0 %v379
    %1088 = vmatprep.subr.mxu0 0.0
    %1089 = vmatpush1.msra.mxu0 %v376
    %1090 = vmatprep.subr.mxu0 0.0
    %1091 = vmatpush2.msra.mxu0 %v469
    %1092 = vmatprep.subr.mxu0 0.0
    %1093 = vmatpush2.msra.mxu0 %v466
    %1094 = vmatprep.subr.mxu0 0.0
    %1095 = vmatpush2.msra.mxu0 %v463
    %1096 = vmatprep.subr.mxu0 0.0
    %1097 = vmatpush2.msra.mxu0 %v460
    %1098 = vmatprep.subr.mxu0 0.0
    %1099 = vmatpush2.msra.mxu0 %v457
    %1100 = vmatprep.subr.mxu0 0.0
    %1101 = vmatpush2.msra.mxu0 %v454
    %1102 = vmatprep.subr.mxu0 0.0
    %1103 = vmatpush2.msra.mxu0 %v451
    %1104 = vmatprep.subr.mxu0 0.0
    %1105 = vmatpush2.msra.mxu0 %v448
    %1106 = vmatprep.subr.mxu0 0.0
    %1107 = vmatpush2.msra.mxu0 %v445
    %1108 = vmatprep.subr.mxu0 0.0
    %1109 = vmatpush2.msra.mxu0 %v442
    %1110 = vmatprep.subr.mxu0 0.0
    %1111 = vmatpush2.msra.mxu0 %v439
    %1112 = vmatprep.subr.mxu0 0.0
    %1113 = vmatpush2.msra.mxu0 %v436
    %1114 = vmatprep.subr.mxu0 0.0
    %1115 = vmatpush2.msra.mxu0 %v433
    %1116 = vmatprep.subr.mxu0 0.0
    %1117 = vmatpush2.msra.mxu0 %v430
    %1118 = vmatprep.subr.mxu0 0.0
    %1119 = vmatpush2.msra.mxu0 %v427
    %1120 = vmatprep.subr.mxu0 0.0
    %1121 = vmatpush2.msra.mxu0 %v424
    %1122 = vmatprep.mubr.f32.mxu0 %v163
    %1123 = vmatmul.mubr.f32.gmra.mxu0 %v162
    %v1124 = vpop.f32.mrf.mxu0
    %v1125 = vadd.f32 %v1045, %v1124
    %v1126 = vpop.f32.mrf.mxu0
    %1127 = vmatprep.mubr.f32.mxu0 %v171
    %1128 = vmatmul.mubr.f32.gmra.mxu0 %v170
    %v1129 = vpop.f32.mrf.mxu0
    %v1130 = vadd.f32 %v1050, %v1129
    %v1131 = vpop.f32.mrf.mxu0
    %1132 = vmatprep.mubr.f32.mxu0 %v179
    %1133 = vmatmul.mubr.f32.gmra.mxu0 %v178
    %v1134 = vpop.f32.mrf.mxu0
    %v1135 = vadd.f32 %v1055, %v1134
    %v1136 = vpop.f32.mrf.mxu0
    %1137 = vdwg.mxu0
    %1138 = vmatprep.subr.mxu0 0.0
    %1139 = vmatpush1.msra.mxu0 %v517
    %1140 = vmatprep.subr.mxu0 0.0
    %1141 = vmatpush1.msra.mxu0 %v514
    %1142 = vmatprep.subr.mxu0 0.0
    %1143 = vmatpush1.msra.mxu0 %v511
    %1144 = vmatprep.subr.mxu0 0.0
    %1145 = vmatpush1.msra.mxu0 %v508
    %1146 = vmatprep.subr.mxu0 0.0
    %1147 = vmatpush1.msra.mxu0 %v505
    %1148 = vmatprep.subr.mxu0 0.0
    %1149 = vmatpush1.msra.mxu0 %v502
    %1150 = vmatprep.subr.mxu0 0.0
    %1151 = vmatpush1.msra.mxu0 %v499
    %1152 = vmatprep.subr.mxu0 0.0
    %1153 = vmatpush1.msra.mxu0 %v496
    %1154 = vmatprep.subr.mxu0 0.0
    %1155 = vmatpush1.msra.mxu0 %v493
    %1156 = vmatprep.subr.mxu0 0.0
    %1157 = vmatpush1.msra.mxu0 %v490
    %1158 = vmatprep.subr.mxu0 0.0
    %1159 = vmatpush1.msra.mxu0 %v487
    %1160 = vmatprep.subr.mxu0 0.0
    %1161 = vmatpush1.msra.mxu0 %v484
    %1162 = vmatprep.subr.mxu0 0.0
    %1163 = vmatpush1.msra.mxu0 %v481
    %1164 = vmatprep.subr.mxu0 0.0
    %1165 = vmatpush1.msra.mxu0 %v478
    %1166 = vmatprep.subr.mxu0 0.0
    %1167 = vmatpush1.msra.mxu0 %v475
    %1168 = vmatprep.subr.mxu0 0.0
    %1169 = vmatpush1.msra.mxu0 %v472
    %1170 = vmatprep.subr.mxu0 0.0
    %1171 = vmatpush2.msra.mxu0 %v565
    %1172 = vmatprep.subr.mxu0 0.0
    %1173 = vmatpush2.msra.mxu0 %v562
    %1174 = vmatprep.subr.mxu0 0.0
    %1175 = vmatpush2.msra.mxu0 %v559
    %1176 = vmatprep.subr.mxu0 0.0
    %1177 = vmatpush2.msra.mxu0 %v556
    %1178 = vmatprep.subr.mxu0 0.0
    %1179 = vmatpush2.msra.mxu0 %v553
    %1180 = vmatprep.subr.mxu0 0.0
    %1181 = vmatpush2.msra.mxu0 %v550
    %1182 = vmatprep.subr.mxu0 0.0
    %1183 = vmatpush2.msra.mxu0 %v547
    %1184 = vmatprep.subr.mxu0 0.0
    %1185 = vmatpush2.msra.mxu0 %v544
    %1186 = vmatprep.subr.mxu0 0.0
    %1187 = vmatpush2.msra.mxu0 %v541
    %1188 = vmatprep.subr.mxu0 0.0
    %1189 = vmatpush2.msra.mxu0 %v538
    %1190 = vmatprep.subr.mxu0 0.0
    %1191 = vmatpush2.msra.mxu0 %v535
    %1192 = vmatprep.subr.mxu0 0.0
    %1193 = vmatpush2.msra.mxu0 %v532
    %1194 = vmatprep.subr.mxu0 0.0
    %1195 = vmatpush2.msra.mxu0 %v529
    %1196 = vmatprep.subr.mxu0 0.0
    %1197 = vmatpush2.msra.mxu0 %v526
    %1198 = vmatprep.subr.mxu0 0.0
    %1199 = vmatpush2.msra.mxu0 %v523
    %1200 = vmatprep.subr.mxu0 0.0
    %1201 = vmatpush2.msra.mxu0 %v520
    %1202 = vmatprep.mubr.f32.mxu0 %v165
    %1203 = vmatmul.mubr.f32.gmra.mxu0 %v164
    %v1204 = vpop.f32.mrf.mxu0
    %v1205 = vadd.f32 %v1125, %v1204
    %v1206 = vpop.f32.mrf.mxu0
    %1207 = vmatprep.mubr.f32.mxu0 %v173
    %1208 = vmatmul.mubr.f32.gmra.mxu0 %v172
    %v1209 = vpop.f32.mrf.mxu0
    %v1210 = vadd.f32 %v1130, %v1209
    %v1211 = vpop.f32.mrf.mxu0
    %1212 = vmatprep.mubr.f32.mxu0 %v181
    %1213 = vmatmul.mubr.f32.gmra.mxu0 %v180
    %v1214 = vpop.f32.mrf.mxu0
    %v1215 = vadd.f32 %v1135, %v1214
    %v1216 = vpop.f32.mrf.mxu0
    %1217 = vdwg.mxu0
    %s1218 = sld [smem:[#allocation2]]
    %v1219 = vstv %s1218
    %v1220 = vmul.f32 %v1219, %v882
    %s1221 = sld [smem:[#allocation2 + $0x1]]
    %v1222 = vstv %s1221
    %v1223 = vmul.f32 %v1222, %v888
    %v1224 = vadd.f32 %v1220, %v1223
    %s1225 = sld [smem:[#allocation2 + $0x2]]
    %v1226 = vstv %s1225
    %v1227 = vmul.f32 %v1226, %v894
    %v1228 = vadd.f32 %v1224, %v1227
    %s1229 = sld [smem:[#allocation6]]
    %v1230 = vstv %s1229
    %v1231 = vadd.f32 %v1228, %v1230
    %s1232 = sld [smem:[#allocation2 + $0x3]]
    %v1233 = vstv %s1232
    %v1234 = vmul.f32 %v1233, %v882
    %s1235 = sld [smem:[#allocation2 + $0x4]]
    %v1236 = vstv %s1235
    %v1237 = vmul.f32 %v1236, %v888
    %v1238 = vadd.f32 %v1234, %v1237
    %s1239 = sld [smem:[#allocation2 + $0x5]]
    %v1240 = vstv %s1239
    %v1241 = vmul.f32 %v1240, %v894
    %v1242 = vadd.f32 %v1238, %v1241
    %s1243 = sld [smem:[#allocation6 + $0x1]]
    %v1244 = vstv %s1243
    %v1245 = vadd.f32 %v1242, %v1244
    %s1246 = sld [smem:[#allocation2 + $0x6]]
    %v1247 = vstv %s1246
    %v1248 = vmul.f32 %v1247, %v882
    %s1249 = sld [smem:[#allocation2 + $0x7]]
    %v1250 = vstv %s1249
    %v1251 = vmul.f32 %v1250, %v888
    %v1252 = vadd.f32 %v1248, %v1251
    %s1253 = sld [smem:[#allocation2 + $0x8]]
    %v1254 = vstv %s1253
    %v1255 = vmul.f32 %v1254, %v894
    %v1256 = vadd.f32 %v1252, %v1255
    %s1257 = sld [smem:[#allocation6 + $0x2]]
    %v1258 = vstv %s1257
    %v1259 = vadd.f32 %v1256, %v1258
    %s1260 = sld [smem:[#allocation2 + $0x9]]
    %v1261 = vstv %s1260
    %v1262 = vmul.f32 %v1261, %v882
    %s1263 = sld [smem:[#allocation2 + $0xa]]
    %v1264 = vstv %s1263
    %v1265 = vmul.f32 %v1264, %v888
    %v1266 = vadd.f32 %v1262, %v1265
    %s1267 = sld [smem:[#allocation2 + $0xb]]
    %v1268 = vstv %s1267
    %v1269 = vmul.f32 %v1268, %v894
    %v1270 = vadd.f32 %v1266, %v1269
    %s1271 = sld [smem:[#allocation6 + $0x3]]
    %v1272 = vstv %s1271
    %v1273 = vadd.f32 %v1270, %v1272
    %s1274 = sld [smem:[#allocation2 + $0xc]]
    %v1275 = vstv %s1274
    %v1276 = vmul.f32 %v1275, %v884
    %s1277 = sld [smem:[#allocation2 + $0xd]]
    %v1278 = vstv %s1277
    %v1279 = vmul.f32 %v1278, %v890
    %v1280 = vadd.f32 %v1276, %v1279
    %s1281 = sld [smem:[#allocation2 + $0xe]]
    %v1282 = vstv %s1281
    %v1283 = vmul.f32 %v1282, %v896
    %v1284 = vadd.f32 %v1280, %v1283
    %s1285 = sld [smem:[#allocation6 + $0x4]]
    %v1286 = vstv %s1285
    %v1287 = vadd.f32 %v1284, %v1286
    %s1288 = sld [smem:[#allocation2 + $0xf]]
    %v1289 = vstv %s1288
    %v1290 = vmul.f32 %v1289, %v884
    %s1291 = sld [smem:[#allocation2 + $0x10]]
    %v1292 = vstv %s1291
    %v1293 = vmul.f32 %v1292, %v890
    %v1294 = vadd.f32 %v1290, %v1293
    %s1295 = sld [smem:[#allocation2 + $0x11]]
    %v1296 = vstv %s1295
    %v1297 = vmul.f32 %v1296, %v896
    %v1298 = vadd.f32 %v1294, %v1297
    %s1299 = sld [smem:[#allocation6 + $0x5]]
    %v1300 = vstv %s1299
    %v1301 = vadd.f32 %v1298, %v1300
    %s1302 = sld [smem:[#allocation2 + $0x12]]
    %v1303 = vstv %s1302
    %v1304 = vmul.f32 %v1303, %v884
    %s1305 = sld [smem:[#allocation2 + $0x13]]
    %v1306 = vstv %s1305
    %v1307 = vmul.f32 %v1306, %v890
    %v1308 = vadd.f32 %v1304, %v1307
    %s1309 = sld [smem:[#allocation2 + $0x14]]
    %v1310 = vstv %s1309
    %v1311 = vmul.f32 %v1310, %v896
    %v1312 = vadd.f32 %v1308, %v1311
    %s1313 = sld [smem:[#allocation6 + $0x6]]
    %v1314 = vstv %s1313
    %v1315 = vadd.f32 %v1312, %v1314
    %s1316 = sld [smem:[#allocation2 + $0x15]]
    %v1317 = vstv %s1316
    %v1318 = vmul.f32 %v1317, %v884
    %s1319 = sld [smem:[#allocation2 + $0x16]]
    %v1320 = vstv %s1319
    %v1321 = vmul.f32 %v1320, %v890
    %v1322 = vadd.f32 %v1318, %v1321
    %s1323 = sld [smem:[#allocation2 + $0x17]]
    %v1324 = vstv %s1323
    %v1325 = vmul.f32 %v1324, %v896
    %v1326 = vadd.f32 %v1322, %v1325
    %s1327 = sld [smem:[#allocation6 + $0x7]]
    %v1328 = vstv %s1327
    %v1329 = vadd.f32 %v1326, %v1328
    %s1330 = sld [smem:[#allocation2 + $0x18]]
    %v1331 = vstv %s1330
    %v1332 = vmul.f32 %v1331, %v1205
    %s1333 = sld [smem:[#allocation2 + $0x19]]
    %v1334 = vstv %s1333
    %v1335 = vmul.f32 %v1334, %v1210
    %v1336 = vadd.f32 %v1332, %v1335
    %s1337 = sld [smem:[#allocation2 + $0x1a]]
    %v1338 = vstv %s1337
    %v1339 = vmul.f32 %v1338, %v1215
    %v1340 = vadd.f32 %v1336, %v1339
    %s1341 = sld [smem:[#allocation6 + $0x8]]
    %v1342 = vstv %s1341
    %v1343 = vadd.f32 %v1340, %v1342
    %s1344 = sld [smem:[#allocation2 + $0x1b]]
    %v1345 = vstv %s1344
    %v1346 = vmul.f32 %v1345, %v1205
    %s1347 = sld [smem:[#allocation2 + $0x1c]]
    %v1348 = vstv %s1347
    %v1349 = vmul.f32 %v1348, %v1210
    %v1350 = vadd.f32 %v1346, %v1349
    %s1351 = sld [smem:[#allocation2 + $0x1d]]
    %v1352 = vstv %s1351
    %v1353 = vmul.f32 %v1352, %v1215
    %v1354 = vadd.f32 %v1350, %v1353
    %s1355 = sld [smem:[#allocation6 + $0x9]]
    %v1356 = vstv %s1355
    %v1357 = vadd.f32 %v1354, %v1356
    %s1358 = sld [smem:[#allocation2 + $0x1e]]
    %v1359 = vstv %s1358
    %v1360 = vmul.f32 %v1359, %v1205
    %s1361 = sld [smem:[#allocation2 + $0x1f]]
    %v1362 = vstv %s1361
    %v1363 = vmul.f32 %v1362, %v1210
    %v1364 = vadd.f32 %v1360, %v1363
    %s1365 = sld [smem:[#allocation2 + $0x20]]
    %v1366 = vstv %s1365
    %v1367 = vmul.f32 %v1366, %v1215
    %v1368 = vadd.f32 %v1364, %v1367
    %s1369 = sld [smem:[#allocation6 + $0xa]]
    %v1370 = vstv %s1369
    %v1371 = vadd.f32 %v1368, %v1370
    %s1372 = sld [smem:[#allocation2 + $0x21]]
    %v1373 = vstv %s1372
    %v1374 = vmul.f32 %v1373, %v1205
    %s1375 = sld [smem:[#allocation2 + $0x22]]
    %v1376 = vstv %s1375
    %v1377 = vmul.f32 %v1376, %v1210
    %v1378 = vadd.f32 %v1374, %v1377
    %s1379 = sld [smem:[#allocation2 + $0x23]]
    %v1380 = vstv %s1379
    %v1381 = vmul.f32 %v1380, %v1215
    %v1382 = vadd.f32 %v1378, %v1381
    %s1383 = sld [smem:[#allocation6 + $0xb]]
    %v1384 = vstv %s1383
    %v1385 = vadd.f32 %v1382, %v1384
    %v1386 = vld [vmem:[#allocation11] sm:$0xff]
    %v1387 = vld [vmem:[#allocation11 + $0x8] sm:$0xff]
    %v1388 = vld [vmem:[#allocation11 + $0x10] sm:$0xff]
    %v1389 = vld [vmem:[#allocation11 + $0x18] sm:$0xff]
    %v1390 = vld [vmem:[#allocation11 + $0x20] sm:$0xff]
    %v1391 = vld [vmem:[#allocation11 + $0x28] sm:$0xff]
    %v1392 = vld [vmem:[#allocation11 + $0x30] sm:$0xff]
    %v1393 = vld [vmem:[#allocation11 + $0x38] sm:$0xff]
    %v1394 = vld [vmem:[#allocation11 + $0x40] sm:$0xff]
    %v1395 = vld [vmem:[#allocation11 + $0x48] sm:$0xff]
    %v1396 = vld [vmem:[#allocation11 + $0x50] sm:$0xff]
    %v1397 = vld [vmem:[#allocation11 + $0x58] sm:$0xff]
    %v1398 = vld [vmem:[#allocation11 + $0x60] sm:$0xff]
    %v1399 = vld [vmem:[#allocation11 + $0x68] sm:$0xff]
    %v1400 = vld [vmem:[#allocation11 + $0x70] sm:$0xff]
    %v1401 = vld [vmem:[#allocation11 + $0x78] sm:$0xff]
    %v1402 = vld [vmem:[#allocation11 + $0x80] sm:$0xff]
    %v1403 = vld [vmem:[#allocation11 + $0x88] sm:$0xff]
    %v1404 = vld [vmem:[#allocation11 + $0x90] sm:$0xff]
    %v1405 = vld [vmem:[#allocation11 + $0x98] sm:$0xff]
    %v1406 = vld [vmem:[#allocation11 + $0xa0] sm:$0xff]
    %v1407 = vld [vmem:[#allocation11 + $0xa8] sm:$0xff]
    %v1408 = vld [vmem:[#allocation11 + $0xb0] sm:$0xff]
    %v1409 = vld [vmem:[#allocation11 + $0xb8] sm:$0xff]
    %v1410 = vld [vmem:[#allocation11 + $0xc0] sm:$0xff]
    %v1411 = vld [vmem:[#allocation11 + $0xc8] sm:$0xff]
    %v1412 = vld [vmem:[#allocation11 + $0xd0] sm:$0xff]
    %v1413 = vld [vmem:[#allocation11 + $0xd8] sm:$0xff]
    %v1414 = vld [vmem:[#allocation11 + $0xe0] sm:$0xff]
    %v1415 = vld [vmem:[#allocation11 + $0xe8] sm:$0xff]
    %v1416 = vld [vmem:[#allocation11 + $0xf0] sm:$0xff]
    %v1417 = vld [vmem:[#allocation11 + $0xf8] sm:$0xff]
    %v1418 = vld [vmem:[#allocation11 + $0x100] sm:$0xff]
    %v1419 = vld [vmem:[#allocation11 + $0x108] sm:$0xff]
    %v1420 = vld [vmem:[#allocation11 + $0x110] sm:$0xff]
    %v1421 = vld [vmem:[#allocation11 + $0x118] sm:$0xff]
    %v1422 = vld [vmem:[#allocation11 + $0x120] sm:$0xff]
    %v1423 = vld [vmem:[#allocation11 + $0x128] sm:$0xff]
    %v1424 = vld [vmem:[#allocation11 + $0x130] sm:$0xff]
    %v1425 = vld [vmem:[#allocation11 + $0x138] sm:$0xff]
    %v1426 = vld [vmem:[#allocation11 + $0x140] sm:$0xff]
    %v1427 = vld [vmem:[#allocation11 + $0x148] sm:$0xff]
    %v1428 = vld [vmem:[#allocation11 + $0x150] sm:$0xff]
    %v1429 = vld [vmem:[#allocation11 + $0x158] sm:$0xff]
    %v1430 = vld [vmem:[#allocation11 + $0x160] sm:$0xff]
    %v1431 = vld [vmem:[#allocation11 + $0x168] sm:$0xff]
    %v1432 = vld [vmem:[#allocation11 + $0x170] sm:$0xff]
    %v1433 = vld [vmem:[#allocation11 + $0x178] sm:$0xff]
    %v1434 = vld [vmem:[#allocation11 + $0x180] sm:$0xff]
    %v1435 = vld [vmem:[#allocation11 + $0x188] sm:$0xff]
    %v1436 = vld [vmem:[#allocation11 + $0x190] sm:$0xff]
    %v1437 = vld [vmem:[#allocation11 + $0x198] sm:$0xff]
    %v1438 = vld [vmem:[#allocation11 + $0x1a0] sm:$0xff]
    %v1439 = vld [vmem:[#allocation11 + $0x1a8] sm:$0xff]
    %v1440 = vld [vmem:[#allocation11 + $0x1b0] sm:$0xff]
    %v1441 = vld [vmem:[#allocation11 + $0x1b8] sm:$0xff]
    %v1442 = vld [vmem:[#allocation11 + $0x1c0] sm:$0xff]
    %v1443 = vld [vmem:[#allocation11 + $0x1c8] sm:$0xff]
    %v1444 = vld [vmem:[#allocation11 + $0x1d0] sm:$0xff]
    %v1445 = vld [vmem:[#allocation11 + $0x1d8] sm:$0xff]
    %v1446 = vld [vmem:[#allocation11 + $0x1e0] sm:$0xff]
    %v1447 = vld [vmem:[#allocation11 + $0x1e8] sm:$0xff]
    %v1448 = vld [vmem:[#allocation11 + $0x1f0] sm:$0xff]
    %v1449 = vld [vmem:[#allocation11 + $0x1f8] sm:$0xff]
    %v1450 = vld [vmem:[#allocation11 + $0x200] sm:$0xff]
    %v1451 = vld [vmem:[#allocation11 + $0x208] sm:$0xff]
    %v1452 = vld [vmem:[#allocation11 + $0x210] sm:$0xff]
    %v1453 = vld [vmem:[#allocation11 + $0x218] sm:$0xff]
    %v1454 = vld [vmem:[#allocation11 + $0x220] sm:$0xff]
    %v1455 = vld [vmem:[#allocation11 + $0x228] sm:$0xff]
    %v1456 = vld [vmem:[#allocation11 + $0x230] sm:$0xff]
    %v1457 = vld [vmem:[#allocation11 + $0x238] sm:$0xff]
    %v1458 = vld [vmem:[#allocation11 + $0x240] sm:$0xff]
    %v1459 = vld [vmem:[#allocation11 + $0x248] sm:$0xff]
    %v1460 = vld [vmem:[#allocation11 + $0x250] sm:$0xff]
    %v1461 = vld [vmem:[#allocation11 + $0x258] sm:$0xff]
    %v1462 = vld [vmem:[#allocation11 + $0x260] sm:$0xff]
    %v1463 = vld [vmem:[#allocation11 + $0x268] sm:$0xff]
    %v1464 = vld [vmem:[#allocation11 + $0x270] sm:$0xff]
    %v1465 = vld [vmem:[#allocation11 + $0x278] sm:$0xff]
    %v1466 = vld [vmem:[#allocation11 + $0x280] sm:$0xff]
    %v1467 = vld [vmem:[#allocation11 + $0x288] sm:$0xff]
    %v1468 = vld [vmem:[#allocation11 + $0x290] sm:$0xff]
    %v1469 = vld [vmem:[#allocation11 + $0x298] sm:$0xff]
    %v1470 = vld [vmem:[#allocation11 + $0x2a0] sm:$0xff]
    %v1471 = vld [vmem:[#allocation11 + $0x2a8] sm:$0xff]
    %v1472 = vld [vmem:[#allocation11 + $0x2b0] sm:$0xff]
    %v1473 = vld [vmem:[#allocation11 + $0x2b8] sm:$0xff]
    %v1474 = vld [vmem:[#allocation11 + $0x2c0] sm:$0xff]
    %v1475 = vld [vmem:[#allocation11 + $0x2c8] sm:$0xff]
    %v1476 = vld [vmem:[#allocation11 + $0x2d0] sm:$0xff]
    %v1477 = vld [vmem:[#allocation11 + $0x2d8] sm:$0xff]
    %v1478 = vld [vmem:[#allocation11 + $0x2e0] sm:$0xff]
    %v1479 = vld [vmem:[#allocation11 + $0x2e8] sm:$0xff]
    %v1480 = vld [vmem:[#allocation11 + $0x2f0] sm:$0xff]
    %v1481 = vld [vmem:[#allocation11 + $0x2f8] sm:$0xff]
    %v1482 = vld [vmem:[#allocation11 + $0x300] sm:$0xff]
    %v1483 = vld [vmem:[#allocation11 + $0x308] sm:$0xff]
    %v1484 = vld [vmem:[#allocation11 + $0x310] sm:$0xff]
    %v1485 = vld [vmem:[#allocation11 + $0x318] sm:$0xff]
    %v1486 = vld [vmem:[#allocation11 + $0x320] sm:$0xff]
    %v1487 = vld [vmem:[#allocation11 + $0x328] sm:$0xff]
    %v1488 = vld [vmem:[#allocation11 + $0x330] sm:$0xff]
    %v1489 = vld [vmem:[#allocation11 + $0x338] sm:$0xff]
    %v1490 = vld [vmem:[#allocation11 + $0x340] sm:$0xff]
    %v1491 = vld [vmem:[#allocation11 + $0x348] sm:$0xff]
    %v1492 = vld [vmem:[#allocation11 + $0x350] sm:$0xff]
    %v1493 = vld [vmem:[#allocation11 + $0x358] sm:$0xff]
    %v1494 = vld [vmem:[#allocation11 + $0x360] sm:$0xff]
    %v1495 = vld [vmem:[#allocation11 + $0x368] sm:$0xff]
    %v1496 = vld [vmem:[#allocation11 + $0x370] sm:$0xff]
    %v1497 = vld [vmem:[#allocation11 + $0x378] sm:$0xff]
    %v1498 = vld [vmem:[#allocation11 + $0x380] sm:$0xff]
    %v1499 = vld [vmem:[#allocation11 + $0x388] sm:$0xff]
    %v1500 = vld [vmem:[#allocation11 + $0x390] sm:$0xff]
    %v1501 = vld [vmem:[#allocation11 + $0x398] sm:$0xff]
    %v1502 = vld [vmem:[#allocation11 + $0x3a0] sm:$0xff]
    %v1503 = vld [vmem:[#allocation11 + $0x3a8] sm:$0xff]
    %v1504 = vld [vmem:[#allocation11 + $0x3b0] sm:$0xff]
    %v1505 = vld [vmem:[#allocation11 + $0x3b8] sm:$0xff]
    %v1506 = vld [vmem:[#allocation11 + $0x3c0] sm:$0xff]
    %v1507 = vld [vmem:[#allocation11 + $0x3c8] sm:$0xff]
    %v1508 = vld [vmem:[#allocation11 + $0x3d0] sm:$0xff]
    %v1509 = vld [vmem:[#allocation11 + $0x3d8] sm:$0xff]
    %v1510 = vld [vmem:[#allocation11 + $0x3e0] sm:$0xff]
    %v1511 = vld [vmem:[#allocation11 + $0x3e8] sm:$0xff]
    %v1512 = vld [vmem:[#allocation11 + $0x3f0] sm:$0xff]
    %v1513 = vld [vmem:[#allocation11 + $0x3f8] sm:$0xff]
    %v1514 = vld [vmem:[#allocation11 + $0x400] sm:$0xff]
    %v1515 = vld [vmem:[#allocation11 + $0x408] sm:$0xff]
    %v1516 = vld [vmem:[#allocation11 + $0x410] sm:$0xff]
    %v1517 = vld [vmem:[#allocation11 + $0x418] sm:$0xff]
    %v1518 = vld [vmem:[#allocation11 + $0x420] sm:$0xff]
    %v1519 = vld [vmem:[#allocation11 + $0x428] sm:$0xff]
    %v1520 = vld [vmem:[#allocation11 + $0x430] sm:$0xff]
    %v1521 = vld [vmem:[#allocation11 + $0x438] sm:$0xff]
    %v1522 = vld [vmem:[#allocation11 + $0x440] sm:$0xff]
    %v1523 = vld [vmem:[#allocation11 + $0x448] sm:$0xff]
    %v1524 = vld [vmem:[#allocation11 + $0x450] sm:$0xff]
    %v1525 = vld [vmem:[#allocation11 + $0x458] sm:$0xff]
    %v1526 = vld [vmem:[#allocation11 + $0x460] sm:$0xff]
    %v1527 = vld [vmem:[#allocation11 + $0x468] sm:$0xff]
    %v1528 = vld [vmem:[#allocation11 + $0x470] sm:$0xff]
    %v1529 = vld [vmem:[#allocation11 + $0x478] sm:$0xff]
    %v1530 = vld [vmem:[#allocation11 + $0x480] sm:$0xff]
    %v1531 = vld [vmem:[#allocation11 + $0x488] sm:$0xff]
    %v1532 = vld [vmem:[#allocation11 + $0x490] sm:$0xff]
    %v1533 = vld [vmem:[#allocation11 + $0x498] sm:$0xff]
    %v1534 = vld [vmem:[#allocation11 + $0x4a0] sm:$0xff]
    %v1535 = vld [vmem:[#allocation11 + $0x4a8] sm:$0xff]
    %v1536 = vld [vmem:[#allocation11 + $0x4b0] sm:$0xff]
    %v1537 = vld [vmem:[#allocation11 + $0x4b8] sm:$0xff]
    %v1538 = vld [vmem:[#allocation11 + $0x4c0] sm:$0xff]
    %v1539 = vld [vmem:[#allocation11 + $0x4c8] sm:$0xff]
    %v1540 = vld [vmem:[#allocation11 + $0x4d0] sm:$0xff]
    %v1541 = vld [vmem:[#allocation11 + $0x4d8] sm:$0xff]
    %v1542 = vld [vmem:[#allocation11 + $0x4e0] sm:$0xff]
    %v1543 = vld [vmem:[#allocation11 + $0x4e8] sm:$0xff]
    %v1544 = vld [vmem:[#allocation11 + $0x4f0] sm:$0xff]
    %v1545 = vld [vmem:[#allocation11 + $0x4f8] sm:$0xff]
    %v1546 = vld [vmem:[#allocation11 + $0x500] sm:$0xff]
    %v1547 = vld [vmem:[#allocation11 + $0x508] sm:$0xff]
    %v1548 = vld [vmem:[#allocation11 + $0x510] sm:$0xff]
    %v1549 = vld [vmem:[#allocation11 + $0x518] sm:$0xff]
    %v1550 = vld [vmem:[#allocation11 + $0x520] sm:$0xff]
    %v1551 = vld [vmem:[#allocation11 + $0x528] sm:$0xff]
    %v1552 = vld [vmem:[#allocation11 + $0x530] sm:$0xff]
    %v1553 = vld [vmem:[#allocation11 + $0x538] sm:$0xff]
    %v1554 = vld [vmem:[#allocation11 + $0x540] sm:$0xff]
    %v1555 = vld [vmem:[#allocation11 + $0x548] sm:$0xff]
    %v1556 = vld [vmem:[#allocation11 + $0x550] sm:$0xff]
    %v1557 = vld [vmem:[#allocation11 + $0x558] sm:$0xff]
    %v1558 = vld [vmem:[#allocation11 + $0x560] sm:$0xff]
    %v1559 = vld [vmem:[#allocation11 + $0x568] sm:$0xff]
    %v1560 = vld [vmem:[#allocation11 + $0x570] sm:$0xff]
    %v1561 = vld [vmem:[#allocation11 + $0x578] sm:$0xff]
    %v1562 = vld [vmem:[#allocation11 + $0x580] sm:$0xff]
    %v1563 = vld [vmem:[#allocation11 + $0x588] sm:$0xff]
    %v1564 = vld [vmem:[#allocation11 + $0x590] sm:$0xff]
    %v1565 = vld [vmem:[#allocation11 + $0x598] sm:$0xff]
    %v1566 = vld [vmem:[#allocation11 + $0x5a0] sm:$0xff]
    %v1567 = vld [vmem:[#allocation11 + $0x5a8] sm:$0xff]
    %v1568 = vld [vmem:[#allocation11 + $0x5b0] sm:$0xff]
    %v1569 = vld [vmem:[#allocation11 + $0x5b8] sm:$0xff]
    %v1570 = vld [vmem:[#allocation11 + $0x5c0] sm:$0xff]
    %v1571 = vld [vmem:[#allocation11 + $0x5c8] sm:$0xff]
    %v1572 = vld [vmem:[#allocation11 + $0x5d0] sm:$0xff]
    %v1573 = vld [vmem:[#allocation11 + $0x5d8] sm:$0xff]
    %v1574 = vld [vmem:[#allocation11 + $0x5e0] sm:$0xff]
    %v1575 = vld [vmem:[#allocation11 + $0x5e8] sm:$0xff]
    %v1576 = vld [vmem:[#allocation11 + $0x5f0] sm:$0xff]
    %v1577 = vld [vmem:[#allocation11 + $0x5f8] sm:$0xff]
    %v1578 = vld [vmem:[#allocation12] sm:$0x1]
    %v1580 = vlaneseq
    %v1581 = vshrl.u32 %v1580, 7
    %v1582 = vsub.s32 0, %v1581
    %v1583 = vrot.slane %v1578, %v1582
    %1585 = vmatprep.subr.mxu0 0.0
    %1586 = vmatpush1.msra.mxu0 %v1401
    %1587 = vmatprep.subr.mxu0 0.0
    %1588 = vmatpush1.msra.mxu0 %v1400
    %1589 = vmatprep.subr.mxu0 0.0
    %1590 = vmatpush1.msra.mxu0 %v1399
    %1591 = vmatprep.subr.mxu0 0.0
    %1592 = vmatpush1.msra.mxu0 %v1398
    %1593 = vmatprep.subr.mxu0 0.0
    %1594 = vmatpush1.msra.mxu0 %v1397
    %1595 = vmatprep.subr.mxu0 0.0
    %1596 = vmatpush1.msra.mxu0 %v1396
    %1597 = vmatprep.subr.mxu0 0.0
    %1598 = vmatpush1.msra.mxu0 %v1395
    %1599 = vmatprep.subr.mxu0 0.0
    %1600 = vmatpush1.msra.mxu0 %v1394
    %1601 = vmatprep.subr.mxu0 0.0
    %1602 = vmatpush1.msra.mxu0 %v1393
    %1603 = vmatprep.subr.mxu0 0.0
    %1604 = vmatpush1.msra.mxu0 %v1392
    %1605 = vmatprep.subr.mxu0 0.0
    %1606 = vmatpush1.msra.mxu0 %v1391
    %1607 = vmatprep.subr.mxu0 0.0
    %1608 = vmatpush1.msra.mxu0 %v1390
    %1609 = vmatprep.subr.mxu0 0.0
    %1610 = vmatpush1.msra.mxu0 %v1389
    %1611 = vmatprep.subr.mxu0 0.0
    %1612 = vmatpush1.msra.mxu0 %v1388
    %1613 = vmatprep.subr.mxu0 0.0
    %1614 = vmatpush1.msra.mxu0 %v1387
    %1615 = vmatprep.subr.mxu0 0.0
    %1616 = vmatpush1.msra.mxu0 %v1386
    %1617 = vmatprep.subr.mxu0 0.0
    %1618 = vmatpush2.msra.mxu0 %v1417
    %1619 = vmatprep.subr.mxu0 0.0
    %1620 = vmatpush2.msra.mxu0 %v1416
    %1621 = vmatprep.subr.mxu0 0.0
    %1622 = vmatpush2.msra.mxu0 %v1415
    %1623 = vmatprep.subr.mxu0 0.0
    %1624 = vmatpush2.msra.mxu0 %v1414
    %1625 = vmatprep.subr.mxu0 0.0
    %1626 = vmatpush2.msra.mxu0 %v1413
    %1627 = vmatprep.subr.mxu0 0.0
    %1628 = vmatpush2.msra.mxu0 %v1412
    %1629 = vmatprep.subr.mxu0 0.0
    %1630 = vmatpush2.msra.mxu0 %v1411
    %1631 = vmatprep.subr.mxu0 0.0
    %1632 = vmatpush2.msra.mxu0 %v1410
    %1633 = vmatprep.subr.mxu0 0.0
    %1634 = vmatpush2.msra.mxu0 %v1409
    %1635 = vmatprep.subr.mxu0 0.0
    %1636 = vmatpush2.msra.mxu0 %v1408
    %1637 = vmatprep.subr.mxu0 0.0
    %1638 = vmatpush2.msra.mxu0 %v1407
    %1639 = vmatprep.subr.mxu0 0.0
    %1640 = vmatpush2.msra.mxu0 %v1406
    %1641 = vmatprep.subr.mxu0 0.0
    %1642 = vmatpush2.msra.mxu0 %v1405
    %1643 = vmatprep.subr.mxu0 0.0
    %1644 = vmatpush2.msra.mxu0 %v1404
    %1645 = vmatprep.subr.mxu0 0.0
    %1646 = vmatpush2.msra.mxu0 %v1403
    %1647 = vmatprep.subr.mxu0 0.0
    %1648 = vmatpush2.msra.mxu0 %v1402
    %1649 = vmatprep.mubr.f32.mxu0 %v1245
    %1650 = vmatmul.mubr.f32.gmra.mxu0 %v1231
    %v1651 = vpop.f32.mrf.mxu0
    %v1652 = vadd.f32 %v1583, %v1651
    %v1653 = vpop.f32.mrf.mxu0
    %1654 = vdwg.mxu0
    %1655 = vmatprep.subr.mxu0 0.0
    %1656 = vmatpush1.msra.mxu0 %v1433
    %1657 = vmatprep.subr.mxu0 0.0
    %1658 = vmatpush1.msra.mxu0 %v1432
    %1659 = vmatprep.subr.mxu0 0.0
    %1660 = vmatpush1.msra.mxu0 %v1431
    %1661 = vmatprep.subr.mxu0 0.0
    %1662 = vmatpush1.msra.mxu0 %v1430
    %1663 = vmatprep.subr.mxu0 0.0
    %1664 = vmatpush1.msra.mxu0 %v1429
    %1665 = vmatprep.subr.mxu0 0.0
    %1666 = vmatpush1.msra.mxu0 %v1428
    %1667 = vmatprep.subr.mxu0 0.0
    %1668 = vmatpush1.msra.mxu0 %v1427
    %1669 = vmatprep.subr.mxu0 0.0
    %1670 = vmatpush1.msra.mxu0 %v1426
    %1671 = vmatprep.subr.mxu0 0.0
    %1672 = vmatpush1.msra.mxu0 %v1425
    %1673 = vmatprep.subr.mxu0 0.0
    %1674 = vmatpush1.msra.mxu0 %v1424
    %1675 = vmatprep.subr.mxu0 0.0
    %1676 = vmatpush1.msra.mxu0 %v1423
    %1677 = vmatprep.subr.mxu0 0.0
    %1678 = vmatpush1.msra.mxu0 %v1422
    %1679 = vmatprep.subr.mxu0 0.0
    %1680 = vmatpush1.msra.mxu0 %v1421
    %1681 = vmatprep.subr.mxu0 0.0
    %1682 = vmatpush1.msra.mxu0 %v1420
    %1683 = vmatprep.subr.mxu0 0.0
    %1684 = vmatpush1.msra.mxu0 %v1419
    %1685 = vmatprep.subr.mxu0 0.0
    %1686 = vmatpush1.msra.mxu0 %v1418
    %1687 = vmatprep.subr.mxu0 0.0
    %1688 = vmatpush2.msra.mxu0 %v1449
    %1689 = vmatprep.subr.mxu0 0.0
    %1690 = vmatpush2.msra.mxu0 %v1448
    %1691 = vmatprep.subr.mxu0 0.0
    %1692 = vmatpush2.msra.mxu0 %v1447
    %1693 = vmatprep.subr.mxu0 0.0
    %1694 = vmatpush2.msra.mxu0 %v1446
    %1695 = vmatprep.subr.mxu0 0.0
    %1696 = vmatpush2.msra.mxu0 %v1445
    %1697 = vmatprep.subr.mxu0 0.0
    %1698 = vmatpush2.msra.mxu0 %v1444
    %1699 = vmatprep.subr.mxu0 0.0
    %1700 = vmatpush2.msra.mxu0 %v1443
    %1701 = vmatprep.subr.mxu0 0.0
    %1702 = vmatpush2.msra.mxu0 %v1442
    %1703 = vmatprep.subr.mxu0 0.0
    %1704 = vmatpush2.msra.mxu0 %v1441
    %1705 = vmatprep.subr.mxu0 0.0
    %1706 = vmatpush2.msra.mxu0 %v1440
    %1707 = vmatprep.subr.mxu0 0.0
    %1708 = vmatpush2.msra.mxu0 %v1439
    %1709 = vmatprep.subr.mxu0 0.0
    %1710 = vmatpush2.msra.mxu0 %v1438
    %1711 = vmatprep.subr.mxu0 0.0
    %1712 = vmatpush2.msra.mxu0 %v1437
    %1713 = vmatprep.subr.mxu0 0.0
    %1714 = vmatpush2.msra.mxu0 %v1436
    %1715 = vmatprep.subr.mxu0 0.0
    %1716 = vmatpush2.msra.mxu0 %v1435
    %1717 = vmatprep.subr.mxu0 0.0
    %1718 = vmatpush2.msra.mxu0 %v1434
    %1719 = vmatprep.mubr.f32.mxu0 %v1273
    %1720 = vmatmul.mubr.f32.gmra.mxu0 %v1259
    %v1721 = vpop.f32.mrf.mxu0
    %v1722 = vadd.f32 %v1652, %v1721
    %v1723 = vpop.f32.mrf.mxu0
    %1724 = vdwg.mxu0
    %1725 = vmatprep.subr.mxu0 0.0
    %1726 = vmatpush1.msra.mxu0 %v1465
    %1727 = vmatprep.subr.mxu0 0.0
    %1728 = vmatpush1.msra.mxu0 %v1464
    %1729 = vmatprep.subr.mxu0 0.0
    %1730 = vmatpush1.msra.mxu0 %v1463
    %1731 = vmatprep.subr.mxu0 0.0
    %1732 = vmatpush1.msra.mxu0 %v1462
    %1733 = vmatprep.subr.mxu0 0.0
    %1734 = vmatpush1.msra.mxu0 %v1461
    %1735 = vmatprep.subr.mxu0 0.0
    %1736 = vmatpush1.msra.mxu0 %v1460
    %1737 = vmatprep.subr.mxu0 0.0
    %1738 = vmatpush1.msra.mxu0 %v1459
    %1739 = vmatprep.subr.mxu0 0.0
    %1740 = vmatpush1.msra.mxu0 %v1458
    %1741 = vmatprep.subr.mxu0 0.0
    %1742 = vmatpush1.msra.mxu0 %v1457
    %1743 = vmatprep.subr.mxu0 0.0
    %1744 = vmatpush1.msra.mxu0 %v1456
    %1745 = vmatprep.subr.mxu0 0.0
    %1746 = vmatpush1.msra.mxu0 %v1455
    %1747 = vmatprep.subr.mxu0 0.0
    %1748 = vmatpush1.msra.mxu0 %v1454
    %1749 = vmatprep.subr.mxu0 0.0
    %1750 = vmatpush1.msra.mxu0 %v1453
    %1751 = vmatprep.subr.mxu0 0.0
    %1752 = vmatpush1.msra.mxu0 %v1452
    %1753 = vmatprep.subr.mxu0 0.0
    %1754 = vmatpush1.msra.mxu0 %v1451
    %1755 = vmatprep.subr.mxu0 0.0
    %1756 = vmatpush1.msra.mxu0 %v1450
    %1757 = vmatprep.subr.mxu0 0.0
    %1758 = vmatpush2.msra.mxu0 %v1481
    %1759 = vmatprep.subr.mxu0 0.0
    %1760 = vmatpush2.msra.mxu0 %v1480
    %1761 = vmatprep.subr.mxu0 0.0
    %1762 = vmatpush2.msra.mxu0 %v1479
    %1763 = vmatprep.subr.mxu0 0.0
    %1764 = vmatpush2.msra.mxu0 %v1478
    %1765 = vmatprep.subr.mxu0 0.0
    %1766 = vmatpush2.msra.mxu0 %v1477
    %1767 = vmatprep.subr.mxu0 0.0
    %1768 = vmatpush2.msra.mxu0 %v1476
    %1769 = vmatprep.subr.mxu0 0.0
    %1770 = vmatpush2.msra.mxu0 %v1475
    %1771 = vmatprep.subr.mxu0 0.0
    %1772 = vmatpush2.msra.mxu0 %v1474
    %1773 = vmatprep.subr.mxu0 0.0
    %1774 = vmatpush2.msra.mxu0 %v1473
    %1775 = vmatprep.subr.mxu0 0.0
    %1776 = vmatpush2.msra.mxu0 %v1472
    %1777 = vmatprep.subr.mxu0 0.0
    %1778 = vmatpush2.msra.mxu0 %v1471
    %1779 = vmatprep.subr.mxu0 0.0
    %1780 = vmatpush2.msra.mxu0 %v1470
    %1781 = vmatprep.subr.mxu0 0.0
    %1782 = vmatpush2.msra.mxu0 %v1469
    %1783 = vmatprep.subr.mxu0 0.0
    %1784 = vmatpush2.msra.mxu0 %v1468
    %1785 = vmatprep.subr.mxu0 0.0
    %1786 = vmatpush2.msra.mxu0 %v1467
    %1787 = vmatprep.subr.mxu0 0.0
    %1788 = vmatpush2.msra.mxu0 %v1466
    %1789 = vmatprep.mubr.f32.mxu0 %v1301
    %1790 = vmatmul.mubr.f32.gmra.mxu0 %v1287
    %v1791 = vpop.f32.mrf.mxu0
    %v1792 = vadd.f32 %v1722, %v1791
    %v1793 = vpop.f32.mrf.mxu0
    %1794 = vdwg.mxu0
    %1795 = vmatprep.subr.mxu0 0.0
    %1796 = vmatpush1.msra.mxu0 %v1497
    %1797 = vmatprep.subr.mxu0 0.0
    %1798 = vmatpush1.msra.mxu0 %v1496
    %1799 = vmatprep.subr.mxu0 0.0
    %1800 = vmatpush1.msra.mxu0 %v1495
    %1801 = vmatprep.subr.mxu0 0.0
    %1802 = vmatpush1.msra.mxu0 %v1494
    %1803 = vmatprep.subr.mxu0 0.0
    %1804 = vmatpush1.msra.mxu0 %v1493
    %1805 = vmatprep.subr.mxu0 0.0
    %1806 = vmatpush1.msra.mxu0 %v1492
    %1807 = vmatprep.subr.mxu0 0.0
    %1808 = vmatpush1.msra.mxu0 %v1491
    %1809 = vmatprep.subr.mxu0 0.0
    %1810 = vmatpush1.msra.mxu0 %v1490
    %1811 = vmatprep.subr.mxu0 0.0
    %1812 = vmatpush1.msra.mxu0 %v1489
    %1813 = vmatprep.subr.mxu0 0.0
    %1814 = vmatpush1.msra.mxu0 %v1488
    %1815 = vmatprep.subr.mxu0 0.0
    %1816 = vmatpush1.msra.mxu0 %v1487
    %1817 = vmatprep.subr.mxu0 0.0
    %1818 = vmatpush1.msra.mxu0 %v1486
    %1819 = vmatprep.subr.mxu0 0.0
    %1820 = vmatpush1.msra.mxu0 %v1485
    %1821 = vmatprep.subr.mxu0 0.0
    %1822 = vmatpush1.msra.mxu0 %v1484
    %1823 = vmatprep.subr.mxu0 0.0
    %1824 = vmatpush1.msra.mxu0 %v1483
    %1825 = vmatprep.subr.mxu0 0.0
    %1826 = vmatpush1.msra.mxu0 %v1482
    %1827 = vmatprep.subr.mxu0 0.0
    %1828 = vmatpush2.msra.mxu0 %v1513
    %1829 = vmatprep.subr.mxu0 0.0
    %1830 = vmatpush2.msra.mxu0 %v1512
    %1831 = vmatprep.subr.mxu0 0.0
    %1832 = vmatpush2.msra.mxu0 %v1511
    %1833 = vmatprep.subr.mxu0 0.0
    %1834 = vmatpush2.msra.mxu0 %v1510
    %1835 = vmatprep.subr.mxu0 0.0
    %1836 = vmatpush2.msra.mxu0 %v1509
    %1837 = vmatprep.subr.mxu0 0.0
    %1838 = vmatpush2.msra.mxu0 %v1508
    %1839 = vmatprep.subr.mxu0 0.0
    %1840 = vmatpush2.msra.mxu0 %v1507
    %1841 = vmatprep.subr.mxu0 0.0
    %1842 = vmatpush2.msra.mxu0 %v1506
    %1843 = vmatprep.subr.mxu0 0.0
    %1844 = vmatpush2.msra.mxu0 %v1505
    %1845 = vmatprep.subr.mxu0 0.0
    %1846 = vmatpush2.msra.mxu0 %v1504
    %1847 = vmatprep.subr.mxu0 0.0
    %1848 = vmatpush2.msra.mxu0 %v1503
    %1849 = vmatprep.subr.mxu0 0.0
    %1850 = vmatpush2.msra.mxu0 %v1502
    %1851 = vmatprep.subr.mxu0 0.0
    %1852 = vmatpush2.msra.mxu0 %v1501
    %1853 = vmatprep.subr.mxu0 0.0
    %1854 = vmatpush2.msra.mxu0 %v1500
    %1855 = vmatprep.subr.mxu0 0.0
    %1856 = vmatpush2.msra.mxu0 %v1499
    %1857 = vmatprep.subr.mxu0 0.0
    %1858 = vmatpush2.msra.mxu0 %v1498
    %1859 = vmatprep.mubr.f32.mxu0 %v1329
    %1860 = vmatmul.mubr.f32.gmra.mxu0 %v1315
    %v1861 = vpop.f32.mrf.mxu0
    %v1862 = vadd.f32 %v1792, %v1861
    %v1863 = vpop.f32.mrf.mxu0
    %1864 = vdwg.mxu0
    %1865 = vmatprep.subr.mxu0 0.0
    %1866 = vmatpush1.msra.mxu0 %v1529
    %1867 = vmatprep.subr.mxu0 0.0
    %1868 = vmatpush1.msra.mxu0 %v1528
    %1869 = vmatprep.subr.mxu0 0.0
    %1870 = vmatpush1.msra.mxu0 %v1527
    %1871 = vmatprep.subr.mxu0 0.0
    %1872 = vmatpush1.msra.mxu0 %v1526
    %1873 = vmatprep.subr.mxu0 0.0
    %1874 = vmatpush1.msra.mxu0 %v1525
    %1875 = vmatprep.subr.mxu0 0.0
    %1876 = vmatpush1.msra.mxu0 %v1524
    %1877 = vmatprep.subr.mxu0 0.0
    %1878 = vmatpush1.msra.mxu0 %v1523
    %1879 = vmatprep.subr.mxu0 0.0
    %1880 = vmatpush1.msra.mxu0 %v1522
    %1881 = vmatprep.subr.mxu0 0.0
    %1882 = vmatpush1.msra.mxu0 %v1521
    %1883 = vmatprep.subr.mxu0 0.0
    %1884 = vmatpush1.msra.mxu0 %v1520
    %1885 = vmatprep.subr.mxu0 0.0
    %1886 = vmatpush1.msra.mxu0 %v1519
    %1887 = vmatprep.subr.mxu0 0.0
    %1888 = vmatpush1.msra.mxu0 %v1518
    %1889 = vmatprep.subr.mxu0 0.0
    %1890 = vmatpush1.msra.mxu0 %v1517
    %1891 = vmatprep.subr.mxu0 0.0
    %1892 = vmatpush1.msra.mxu0 %v1516
    %1893 = vmatprep.subr.mxu0 0.0
    %1894 = vmatpush1.msra.mxu0 %v1515
    %1895 = vmatprep.subr.mxu0 0.0
    %1896 = vmatpush1.msra.mxu0 %v1514
    %1897 = vmatprep.subr.mxu0 0.0
    %1898 = vmatpush2.msra.mxu0 %v1545
    %1899 = vmatprep.subr.mxu0 0.0
    %1900 = vmatpush2.msra.mxu0 %v1544
    %1901 = vmatprep.subr.mxu0 0.0
    %1902 = vmatpush2.msra.mxu0 %v1543
    %1903 = vmatprep.subr.mxu0 0.0
    %1904 = vmatpush2.msra.mxu0 %v1542
    %1905 = vmatprep.subr.mxu0 0.0
    %1906 = vmatpush2.msra.mxu0 %v1541
    %1907 = vmatprep.subr.mxu0 0.0
    %1908 = vmatpush2.msra.mxu0 %v1540
    %1909 = vmatprep.subr.mxu0 0.0
    %1910 = vmatpush2.msra.mxu0 %v1539
    %1911 = vmatprep.subr.mxu0 0.0
    %1912 = vmatpush2.msra.mxu0 %v1538
    %1913 = vmatprep.subr.mxu0 0.0
    %1914 = vmatpush2.msra.mxu0 %v1537
    %1915 = vmatprep.subr.mxu0 0.0
    %1916 = vmatpush2.msra.mxu0 %v1536
    %1917 = vmatprep.subr.mxu0 0.0
    %1918 = vmatpush2.msra.mxu0 %v1535
    %1919 = vmatprep.subr.mxu0 0.0
    %1920 = vmatpush2.msra.mxu0 %v1534
    %1921 = vmatprep.subr.mxu0 0.0
    %1922 = vmatpush2.msra.mxu0 %v1533
    %1923 = vmatprep.subr.mxu0 0.0
    %1924 = vmatpush2.msra.mxu0 %v1532
    %1925 = vmatprep.subr.mxu0 0.0
    %1926 = vmatpush2.msra.mxu0 %v1531
    %1927 = vmatprep.subr.mxu0 0.0
    %1928 = vmatpush2.msra.mxu0 %v1530
    %1929 = vmatprep.mubr.f32.mxu0 %v1357
    %1930 = vmatmul.mubr.f32.gmra.mxu0 %v1343
    %v1931 = vpop.f32.mrf.mxu0
    %v1932 = vadd.f32 %v1862, %v1931
    %v1933 = vpop.f32.mrf.mxu0
    %1934 = vdwg.mxu0
    %1935 = vmatprep.subr.mxu0 0.0
    %1936 = vmatpush1.msra.mxu0 %v1561
    %1937 = vmatprep.subr.mxu0 0.0
    %1938 = vmatpush1.msra.mxu0 %v1560
    %1939 = vmatprep.subr.mxu0 0.0
    %1940 = vmatpush1.msra.mxu0 %v1559
    %1941 = vmatprep.subr.mxu0 0.0
    %1942 = vmatpush1.msra.mxu0 %v1558
    %1943 = vmatprep.subr.mxu0 0.0
    %1944 = vmatpush1.msra.mxu0 %v1557
    %1945 = vmatprep.subr.mxu0 0.0
    %1946 = vmatpush1.msra.mxu0 %v1556
    %1947 = vmatprep.subr.mxu0 0.0
    %1948 = vmatpush1.msra.mxu0 %v1555
    %1949 = vmatprep.subr.mxu0 0.0
    %1950 = vmatpush1.msra.mxu0 %v1554
    %1951 = vmatprep.subr.mxu0 0.0
    %1952 = vmatpush1.msra.mxu0 %v1553
    %1953 = vmatprep.subr.mxu0 0.0
    %1954 = vmatpush1.msra.mxu0 %v1552
    %1955 = vmatprep.subr.mxu0 0.0
    %1956 = vmatpush1.msra.mxu0 %v1551
    %1957 = vmatprep.subr.mxu0 0.0
    %1958 = vmatpush1.msra.mxu0 %v1550
    %1959 = vmatprep.subr.mxu0 0.0
    %1960 = vmatpush1.msra.mxu0 %v1549
    %1961 = vmatprep.subr.mxu0 0.0
    %1962 = vmatpush1.msra.mxu0 %v1548
    %1963 = vmatprep.subr.mxu0 0.0
    %1964 = vmatpush1.msra.mxu0 %v1547
    %1965 = vmatprep.subr.mxu0 0.0
    %1966 = vmatpush1.msra.mxu0 %v1546
    %1967 = vmatprep.subr.mxu0 0.0
    %1968 = vmatpush2.msra.mxu0 %v1577
    %1969 = vmatprep.subr.mxu0 0.0
    %1970 = vmatpush2.msra.mxu0 %v1576
    %1971 = vmatprep.subr.mxu0 0.0
    %1972 = vmatpush2.msra.mxu0 %v1575
    %1973 = vmatprep.subr.mxu0 0.0
    %1974 = vmatpush2.msra.mxu0 %v1574
    %1975 = vmatprep.subr.mxu0 0.0
    %1976 = vmatpush2.msra.mxu0 %v1573
    %1977 = vmatprep.subr.mxu0 0.0
    %1978 = vmatpush2.msra.mxu0 %v1572
    %1979 = vmatprep.subr.mxu0 0.0
    %1980 = vmatpush2.msra.mxu0 %v1571
    %1981 = vmatprep.subr.mxu0 0.0
    %1982 = vmatpush2.msra.mxu0 %v1570
    %1983 = vmatprep.subr.mxu0 0.0
    %1984 = vmatpush2.msra.mxu0 %v1569
    %1985 = vmatprep.subr.mxu0 0.0
    %1986 = vmatpush2.msra.mxu0 %v1568
    %1987 = vmatprep.subr.mxu0 0.0
    %1988 = vmatpush2.msra.mxu0 %v1567
    %1989 = vmatprep.subr.mxu0 0.0
    %1990 = vmatpush2.msra.mxu0 %v1566
    %1991 = vmatprep.subr.mxu0 0.0
    %1992 = vmatpush2.msra.mxu0 %v1565
    %1993 = vmatprep.subr.mxu0 0.0
    %1994 = vmatpush2.msra.mxu0 %v1564
    %1995 = vmatprep.subr.mxu0 0.0
    %1996 = vmatpush2.msra.mxu0 %v1563
    %1997 = vmatprep.subr.mxu0 0.0
    %1998 = vmatpush2.msra.mxu0 %v1562
    %1999 = vmatprep.mubr.f32.mxu0 %v1385
    %2000 = vmatmul.mubr.f32.gmra.mxu0 %v1371
    %v2001 = vpop.f32.mrf.mxu0
    %v2002 = vadd.f32 %v1932, %v2001
    %v2003 = vpop.f32.mrf.mxu0
    %2004 = vdwg.mxu0
    %v2005 = vsub.f32 0.0, %v2002
    %v2006 = vmul.f32 %v2005, 1.442695
    %v2007 = vpow.pop %v2006
    %v2008 = vadd.f32 %v2007, 1.0
    %v2009 = vrcp.pop %v2008
    %v2010 = vmul.f32 %v2002, %v2009
    %2011 = vadd.xlane.f32.xlu0 %v2010
    %v2012 = vpop.xlane.xlu0 %2011
    %v2013 = vrcp.pop 128.0
    %v2014 = vmul.f32 %v2012, %v2013
    %v2015 = vsub.f32 %v2010, %v2014
    %v2016 = vmul.f32 %v2015, %v2015
    %2017 = vadd.xlane.f32.xlu0 %v2016
    %v2018 = vpop.xlane.xlu0 %2017
    %v2019 = vmul.f32 %v2018, %v2013
    %v2020 = vadd.f32 %v2019, 1e-05
    %v2021 = vrsqrt.pop %v2020
    %v2022 = vmul.f32 %v2015, %v2021
    %v2023 = vld [vmem:[#allocation14] sm:$0x1]
    %v2025 = vlaneseq
    %v2026 = vshrl.u32 %v2025, 7
    %v2027 = vsub.s32 0, %v2026
    %v2028 = vrot.slane %v2023, %v2027
    %v2030 = vmul.f32 %v2022, %v2028
    %v2031 = vld [vmem:[#allocation15] sm:$0x1]
    %v2033 = vlaneseq
    %v2034 = vshrl.u32 %v2033, 7
    %v2035 = vsub.s32 0, %v2034
    %v2036 = vrot.slane %v2031, %v2035
    %v2038 = vadd.f32 %v2030, %v2036
    %v2039 = vld [vmem:[#allocation17] sm:$0xff]
    %v2040 = vld [vmem:[#allocation17 + $0x8] sm:$0xff]
    %v2041 = vld [vmem:[#allocation17 + $0x10] sm:$0xff]
    %v2042 = vld [vmem:[#allocation17 + $0x18] sm:$0xff]
    %v2043 = vld [vmem:[#allocation17 + $0x20] sm:$0xff]
    %v2044 = vld [vmem:[#allocation17 + $0x28] sm:$0xff]
    %v2045 = vld [vmem:[#allocation17 + $0x30] sm:$0xff]
    %v2046 = vld [vmem:[#allocation17 + $0x38] sm:$0xff]
    %v2047 = vld [vmem:[#allocation17 + $0x40] sm:$0xff]
    %v2048 = vld [vmem:[#allocation17 + $0x48] sm:$0xff]
    %v2049 = vld [vmem:[#allocation17 + $0x50] sm:$0xff]
    %v2050 = vld [vmem:[#allocation17 + $0x58] sm:$0xff]
    %v2051 = vld [vmem:[#allocation17 + $0x60] sm:$0xff]
    %v2052 = vld [vmem:[#allocation17 + $0x68] sm:$0xff]
    %v2053 = vld [vmem:[#allocation17 + $0x70] sm:$0xff]
    %v2054 = vld [vmem:[#allocation17 + $0x78] sm:$0xff]
    %v2055 = vld [vmem:[#allocation18] sm:$0x1]
    %v2057 = vlaneseq
    %v2058 = vshrl.u32 %v2057, 7
    %v2059 = vsub.s32 0, %v2058
    %v2060 = vrot.slane %v2055, %v2059
    %2062 = vmatprep.subr.mxu0 0.0
    %2063 = vmatpush1.msra.mxu0 %v2054
    %2064 = vmatprep.subr.mxu0 0.0
    %2065 = vmatpush1.msra.mxu0 %v2053
    %2066 = vmatprep.subr.mxu0 0.0
    %2067 = vmatpush1.msra.mxu0 %v2052
    %2068 = vmatprep.subr.mxu0 0.0
    %2069 = vmatpush1.msra.mxu0 %v2051
    %2070 = vmatprep.subr.mxu0 0.0
    %2071 = vmatpush1.msra.mxu0 %v2050
    %2072 = vmatprep.subr.mxu0 0.0
    %2073 = vmatpush1.msra.mxu0 %v2049
    %2074 = vmatprep.subr.mxu0 0.0
    %2075 = vmatpush1.msra.mxu0 %v2048
    %2076 = vmatprep.subr.mxu0 0.0
    %2077 = vmatpush1.msra.mxu0 %v2047
    %2078 = vmatprep.subr.mxu0 0.0
    %2079 = vmatpush1.msra.mxu0 %v2046
    %2080 = vmatprep.subr.mxu0 0.0
    %2081 = vmatpush1.msra.mxu0 %v2045
    %2082 = vmatprep.subr.mxu0 0.0
    %2083 = vmatpush1.msra.mxu0 %v2044
    %2084 = vmatprep.subr.mxu0 0.0
    %2085 = vmatpush1.msra.mxu0 %v2043
    %2086 = vmatprep.subr.mxu0 0.0
    %2087 = vmatpush1.msra.mxu0 %v2042
    %2088 = vmatprep.subr.mxu0 0.0
    %2089 = vmatpush1.msra.mxu0 %v2041
    %2090 = vmatprep.subr.mxu0 0.0
    %2091 = vmatpush1.msra.mxu0 %v2040
    %2092 = vmatprep.subr.mxu0 0.0
    %2093 = vmatpush1.msra.mxu0 %v2039
    %2094 = vmatprep.subr.mxu0 0.0
    %2095 = vmatpush2.msra.mxu0 0.0
    %2096 = vmatprep.subr.mxu0 0.0
    %2097 = vmatpush2.msra.mxu0 0.0
    %2098 = vmatprep.subr.mxu0 0.0
    %2099 = vmatpush2.msra.mxu0 0.0
    %2100 = vmatprep.subr.mxu0 0.0
    %2101 = vmatpush2.msra.mxu0 0.0
    %2102 = vmatprep.subr.mxu0 0.0
    %2103 = vmatpush2.msra.mxu0 0.0
    %2104 = vmatprep.subr.mxu0 0.0
    %2105 = vmatpush2.msra.mxu0 0.0
    %2106 = vmatprep.subr.mxu0 0.0
    %2107 = vmatpush2.msra.mxu0 0.0
    %2108 = vmatprep.subr.mxu0 0.0
    %2109 = vmatpush2.msra.mxu0 0.0
    %2110 = vmatprep.subr.mxu0 0.0
    %2111 = vmatpush2.msra.mxu0 0.0
    %2112 = vmatprep.subr.mxu0 0.0
    %2113 = vmatpush2.msra.mxu0 0.0
    %2114 = vmatprep.subr.mxu0 0.0
    %2115 = vmatpush2.msra.mxu0 0.0
    %2116 = vmatprep.subr.mxu0 0.0
    %2117 = vmatpush2.msra.mxu0 0.0
    %2118 = vmatprep.subr.mxu0 0.0
    %2119 = vmatpush2.msra.mxu0 0.0
    %2120 = vmatprep.subr.mxu0 0.0
    %2121 = vmatpush2.msra.mxu0 0.0
    %2122 = vmatprep.subr.mxu0 0.0
    %2123 = vmatpush2.msra.mxu0 0.0
    %2124 = vmatprep.subr.mxu0 0.0
    %2125 = vmatpush2.msra.mxu0 0.0
    %2126 = vmatprep.mubr.f32.mxu0 0.0
    %2127 = vmatmul.mubr.f32.gmra.mxu0 %v2038
    %v2128 = vpop.f32.mrf.mxu0
    %v2129 = vadd.f32 %v2060, %v2128
    %v2130 = vpop.f32.mrf.mxu0
    %2131 = vdwg.mxu0
    %2132 = vst [vmem:[#allocation20] sm:$0xff] %v2129
    // Predicated region
    $region82: #{tpu_custom_call.1} parent=1 // pred_check
      _
    $region83: #{tpu_custom_call.1} parent=1 // pred_check_branch
      %2134 = sbr.rel (0) target = $region85
    $region84: #{tpu_custom_call.1} parent=1 // pred_region
      %s2136 = ssub.s32 128, 128
      %2137 = vsyncadd [#allocation4], %s2136
      %s2139 = sshll.u32 [#allocation20], 4
      %s2140 = int_to_ptr.vmem [resolvable:$true] %s2139
      %2142 = dma.vmem_to_hbm [thread:$0]  %s2140, 128, %s10, [#allocation4]
    $region85: #{tpu_custom_call.1} parent=1 // pred_fallthru
      _
    // Predicated region
    $region86: #{tpu_custom_call.1} parent=1 // pred_check
      _
    $region87: #{tpu_custom_call.1} parent=1 // pred_check_branch
      %2144 = sbr.rel (0) target = $region89
    $region88: #{tpu_custom_call.1} parent=1 // pred_region
      %2145 = dma.done [#allocation4], 128
    $region89: #{tpu_custom_call.1} parent=1 // pred_fallthru
      _
    %2146 = vsyncpa [#allocation3], 1
    %2147 = vsyncpa [#allocation10], 1
    %2148 = vsyncpa [#allocation13], 1
    %2149 = vsyncpa [#allocation16], 1
    %2150 = vsyncpa [#allocation19], 1
    %2151 = vsyncpa [#allocation4], 1
    %2152 = vsyncpa [#allocation5], 1
    %2153 = vsyncpa [#allocation7], 1

</llo_original>
